<compile_context>
chip_gen: v5e
topology: v5e:2x2
jax: 0.10.0
libtpu: 0.0.40
codegen_flags: <defaults>
</compile_context>

<pallas_src>
import math
import jax
import jax.numpy as jnp
from jax.experimental import pallas as pl
from jax.experimental.pallas import tpu as pltpu

# ---- model / problem sizes (small, consistent with the module) ----
B, N, D = 2, 16, 32          # batches, points per batch, query_dim
H, DH = 4, 8                 # n_heads, d_head
INNER = H * DH               # 32
DC, L = 16, 8                # context_dim, context_len
FF = 4 * D                   # FeedForward inner dim (mult=4)
SCALE = DH ** (-0.5)
EPS = 1e-5

NT = B * N                   # 32 fused query rows
LT = B * L                   # 16 fused context rows
assert N & (N - 1) == 0 and L & (L - 1) == 0
N_SHIFT = N.bit_length() - 1
L_SHIFT = L.bit_length() - 1

# ---- packed-parameter slab layout (rows multiples of 8, 128 lanes wide) ----
SLAB_W = 128
R_QKV1 = 0                    # (D, 3*INNER)  [wq1|wk1|wv1]
R_WO1  = R_QKV1 + D           # (INNER, D)
R_WQ2  = R_WO1 + INNER        # (D, INNER)
R_WKV2 = R_WQ2 + D            # (DC, 2*INNER) [wk2|wv2]
R_WO2  = R_WKV2 + DC          # (INNER, D)
R_FF1V = R_WO2 + INNER        # (D, FF)   GEGLU "value" half of wff1
R_FF1G = R_FF1V + D           # (D, FF)   GEGLU "gate"  half of wff1
R_FF2  = R_FF1G + D           # (FF, D)
R_VEC  = R_FF2 + FF           # (16, 128) small vectors, one per row (see pack_params)
SLAB_ROWS = R_VEC + 16        # 352


# ---------------- shared math helpers (usable in and out of the kernel) ----------------
def _layernorm(v, w, b):
    mu = jnp.mean(v, axis=-1, keepdims=True)
    var = jnp.mean((v - mu) ** 2, axis=-1, keepdims=True)
    return (v - mu) * jax.lax.rsqrt(var + EPS) * w + b


def _gelu(x):  # exact (erf) GELU, matching torch.nn.functional.gelu default
    return 0.5 * x * (1.0 + jax.lax.erf(x * (1.0 / math.sqrt(2.0))))


# ---------------------------- Pallas kernel ----------------------------
def _attention(q, k, v, wo, bo, mask):
    """q: (Nq, INNER) pre-scaled, k/v: (Nk, INNER). Per-head 2-D score matmuls,
    one batched masked softmax, per-head PV, then ONE fused output projection."""
    sims = []
    for h in range(H):
        qh = q[:, h * DH:(h + 1) * DH]
        kh = k[:, h * DH:(h + 1) * DH]
        sims.append(jax.lax.dot_general(qh, kh, (((1,), (1,)), ((), ())),
                                        preferred_element_type=jnp.float32))
    sim = jnp.stack(sims, axis=0)                       # (H, Nq, Nk)
    sim = jnp.where(mask[None], sim, -1e30)             # block-diagonal batch mask
    sim = sim - jnp.max(sim, axis=-1, keepdims=True)
    p = jnp.exp(sim)
    denom = jnp.sum(p, axis=-1, keepdims=True)
    attn = p * pl.reciprocal(denom, approx=True)        # divide on the idle EUP slot
    outs = []
    for h in range(H):
        vh = v[:, h * DH:(h + 1) * DH]
        outs.append(jnp.dot(attn[h], vh, preferred_element_type=jnp.float32))
    o = jnp.concatenate(outs, axis=-1)                  # (Nq, INNER)
    return jnp.dot(o, wo, preferred_element_type=jnp.float32) + bo


def transformer_block_kernel(x_ref, ctx_ref, p_ref, out_ref):
    f32 = jnp.float32
    x = x_ref[...]           # (NT, D)   both batches fused
    ctx = ctx_ref[...]       # (LT, DC)  both batches' context fused

    # ---- unpack the single packed parameter slab (static ref slices) ----
    wqkv1 = p_ref[R_QKV1:R_QKV1 + D, 0:3 * INNER]
    wo1   = p_ref[R_WO1:R_WO1 + INNER, 0:D]
    wq2   = p_ref[R_WQ2:R_WQ2 + D, 0:INNER]
    wkv2  = p_ref[R_WKV2:R_WKV2 + DC, 0:2 * INNER]
    wo2   = p_ref[R_WO2:R_WO2 + INNER, 0:D]
    wff1v = p_ref[R_FF1V:R_FF1V + D, 0:FF]
    wff1g = p_ref[R_FF1G:R_FF1G + D, 0:FF]
    wff2  = p_ref[R_FF2:R_FF2 + FF, 0:D]
    ln1w  = p_ref[R_VEC + 0:R_VEC + 1, 0:D]
    ln1b  = p_ref[R_VEC + 1:R_VEC + 2, 0:D]
    bo1   = p_ref[R_VEC + 2:R_VEC + 3, 0:D]
    ln2w  = p_ref[R_VEC + 3:R_VEC + 4, 0:D]
    ln2b  = p_ref[R_VEC + 4:R_VEC + 5, 0:D]
    bo2   = p_ref[R_VEC + 5:R_VEC + 6, 0:D]
    ln3w  = p_ref[R_VEC + 6:R_VEC + 7, 0:D]
    ln3b  = p_ref[R_VEC + 7:R_VEC + 8, 0:D]
    bff1v = p_ref[R_VEC + 8:R_VEC + 9, 0:FF]
    bff1g = p_ref[R_VEC + 9:R_VEC + 10, 0:FF]
    bff2  = p_ref[R_VEC + 10:R_VEC + 11, 0:D]

    # ---- block-diagonal batch masks (enforce per-batch attention in the fused problem)
    rs = jax.lax.shift_right_logical(
        jax.lax.broadcasted_iota(jnp.int32, (NT, NT), 0), N_SHIFT)
    cs = jax.lax.shift_right_logical(
        jax.lax.broadcasted_iota(jnp.int32, (NT, NT), 1), N_SHIFT)
    mask_self = rs == cs                                  # (NT, NT)
    rx = jax.lax.shift_right_logical(
        jax.lax.broadcasted_iota(jnp.int32, (NT, LT), 0), N_SHIFT)
    cx = jax.lax.shift_right_logical(
        jax.lax.broadcasted_iota(jnp.int32, (NT, LT), 1), L_SHIFT)
    mask_cross = rx == cx                                 # (NT, LT)

    # ---- self-attention: x = attn1(norm1(x)) + x ----
    h1 = _layernorm(x, ln1w, ln1b)
    qkv = jnp.dot(h1, wqkv1, preferred_element_type=f32)  # one wide MXU push (NT, 96)
    q = qkv[:, 0:INNER] * SCALE
    k = qkv[:, INNER:2 * INNER]
    v = qkv[:, 2 * INNER:3 * INNER]
    x = x + _attention(q, k, v, wo1, bo1, mask_self)

    # ---- cross-attention: x = attn2(norm2(x), context) + x ----
    h2 = _layernorm(x, ln2w, ln2b)
    q = jnp.dot(h2, wq2, preferred_element_type=f32) * SCALE
    kv = jnp.dot(ctx, wkv2, preferred_element_type=f32)   # fused K|V (LT, 64)
    k = kv[:, 0:INNER]
    v = kv[:, INNER:2 * INNER]
    x = x + _attention(q, k, v, wo2, bo2, mask_cross)

    # ---- feed-forward (GEGLU): x = ff(norm3(x)) + x ----
    h3 = _layernorm(x, ln3w, ln3b)
    val = jnp.dot(h3, wff1v, preferred_element_type=f32) + bff1v
    gate = jnp.dot(h3, wff1g, preferred_element_type=f32) + bff1g
    ff = val * _gelu(gate)
    x = x + jnp.dot(ff, wff2, preferred_element_type=f32) + bff2

    out_ref[...] = x.astype(out_ref.dtype)


# ---------------------------- wrapper ----------------------------
def pack_params(params):
    """Pack all 20 weight/bias tensors into one (SLAB_ROWS, 128) f32 slab."""
    (ln1w, ln1b, wq1, wk1, wv1, wo1, bo1,
     ln2w, ln2b, wq2, wk2, wv2, wo2, bo2,
     ln3w, ln3b, wff1, bff1, wff2, bff2) = params
    slab = jnp.zeros((SLAB_ROWS, SLAB_W), jnp.float32)

    def put(s, r, arr):
        return s.at[r:r + arr.shape[0], 0:arr.shape[1]].set(arr.astype(jnp.float32))

    slab = put(slab, R_QKV1, jnp.concatenate([wq1, wk1, wv1], axis=1))
    slab = put(slab, R_WO1, wo1)
    slab = put(slab, R_WQ2, wq2)
    slab = put(slab, R_WKV2, jnp.concatenate([wk2, wv2], axis=1))
    slab = put(slab, R_WO2, wo2)
    slab = put(slab, R_FF1V, wff1[:, :FF])
    slab = put(slab, R_FF1G, wff1[:, FF:])
    slab = put(slab, R_FF2, wff2)
    slab = put(slab, R_VEC + 0, ln1w)
    slab = put(slab, R_VEC + 1, ln1b)
    slab = put(slab, R_VEC + 2, bo1)
    slab = put(slab, R_VEC + 3, ln2w)
    slab = put(slab, R_VEC + 4, ln2b)
    slab = put(slab, R_VEC + 5, bo2)
    slab = put(slab, R_VEC + 6, ln3w)
    slab = put(slab, R_VEC + 7, ln3b)
    slab = put(slab, R_VEC + 8, bff1[:, :FF])
    slab = put(slab, R_VEC + 9, bff1[:, FF:])
    slab = put(slab, R_VEC + 10, bff2)
    return slab


def basic_transformer_block(x, context, params):
    """x: [B, N, D] f32, context: [B, L, DC] f32, params: list of 20 f32 arrays."""
    slab = pack_params(params)
    x2 = x.reshape(NT, D)
    ctx2 = context.reshape(LT, DC)

    out = pl.pallas_call(
        transformer_block_kernel,
        out_shape=jax.ShapeDtypeStruct((NT, D), jnp.float32),
        grid_spec=pltpu.PrefetchScalarGridSpec(
            num_scalar_prefetch=0,
            grid=(1,),                                   # single step: no per-batch grid loop
            in_specs=[
                pl.BlockSpec((NT, D), lambda i: (0, 0)),
                pl.BlockSpec((LT, DC), lambda i: (0, 0)),
                pl.BlockSpec((SLAB_ROWS, SLAB_W), lambda i: (0, 0)),
            ],
            out_specs=pl.BlockSpec((NT, D), lambda i: (0, 0)),
        ),
        compiler_params=pltpu.CompilerParams(dimension_semantics=("arbitrary",)),
    )(x2, ctx2, slab)
    return out.reshape(B, N, D)


# ---------------------------- pure-JAX reference ----------------------------
def reference(x, ctx, params):
    (ln1w, ln1b, wq1, wk1, wv1, wo1, bo1,
     ln2w, ln2b, wq2, wk2, wv2, wo2, bo2,
     ln3w, ln3b, wff1, bff1, wff2, bff2) = params

    def mha(q_in, kv_in, wq, wk, wv, wo, bo):
        q = q_in @ wq
        k = kv_in @ wk
        v = kv_in @ wv
        acc = jnp.zeros((q_in.shape[0], wo.shape[1]), jnp.float32)
        for h in range(H):
            qh = q[:, h * DH:(h + 1) * DH]
            kh = k[:, h * DH:(h + 1) * DH]
            vh = v[:, h * DH:(h + 1) * DH]
            sim = (qh @ kh.T) * SCALE
            attn = jax.nn.softmax(sim, axis=-1)
            acc = acc + (attn @ vh) @ wo[h * DH:(h + 1) * DH, :]
        return acc + bo

    def one(xb, cb):
        h1 = _layernorm(xb, ln1w, ln1b)
        xb = xb + mha(h1, h1, wq1, wk1, wv1, wo1, bo1)
        h2 = _layernorm(xb, ln2w, ln2b)
        xb = xb + mha(h2, cb, wq2, wk2, wv2, wo2, bo2)
        h3 = _layernorm(xb, ln3w, ln3b)
        proj = h3 @ wff1 + bff1
        ff = proj[:, :FF] * _gelu(proj[:, FF:])
        return xb + ff @ wff2 + bff2

    return jnp.stack([one(x[i], ctx[i]) for i in range(B)])


# ---------------------------- parameter init ----------------------------
def make_params(key):
    ks = jax.random.split(key, 24)
    f32 = jnp.float32

    def lin(k, fi, fo):  # nn.Linear-style weight, stored as [in, out]
        return jax.random.normal(k, (fi, fo), f32) / math.sqrt(fi)

    params = [
        # norm1
        1.0 + 0.1 * jax.random.normal(ks[0], (1, D), f32),
        0.1 * jax.random.normal(ks[1], (1, D), f32),
        # attn1 (self): to_q, to_k, to_v (no bias), to_out (bias)
        lin(ks[2], D, INNER), lin(ks[3], D, INNER), lin(ks[4], D, INNER),
        lin(ks[5], INNER, D), 0.1 * jax.random.normal(ks[6], (1, D), f32),
        # norm2
        1.0 + 0.1 * jax.random.normal(ks[7], (1, D), f32),
        0.1 * jax.random.normal(ks[8], (1, D), f32),
        # attn2 (cross): q from x, k/v from context
        lin(ks[9], D, INNER), lin(ks[10], DC, INNER), lin(ks[11], DC, INNER),
        lin(ks[12], INNER, D), 0.1 * jax.random.normal(ks[13], (1, D), f32),
        # norm3
        1.0 + 0.1 * jax.random.normal(ks[14], (1, D), f32),
        0.1 * jax.random.normal(ks[15], (1, D), f32),
        # ff: GEGLU proj (D -> 2*FF) with bias, then FF -> D with bias
        lin(ks[16], D, 2 * FF), 0.1 * jax.random.normal(ks[17], (1, 2 * FF), f32),
        lin(ks[18], FF, D), 0.1 * jax.random.normal(ks[19], (1, D), f32),
    ]
    return params


if __name__ == "__main__":
    key = jax.random.PRNGKey(0)
    kx, kc, kp = jax.random.split(key, 3)
    x = jax.random.normal(kx, (B, N, D), jnp.float32)
    context = jax.random.normal(kc, (B, L, DC), jnp.float32)
    params = make_params(kp)

    run = jax.jit(basic_transformer_block)
    out = jax.block_until_ready(run(x, context, params))

    ref = jax.block_until_ready(reference(x, context, params))
    assert out.shape == (B, N, D)
    assert jnp.allclose(out, ref, rtol=5e-2, atol=5e-2), (
        f"max abs diff {float(jnp.max(jnp.abs(out - ref)))}"
    )
    print("KERNEL_OK")
</pallas_src>

<mosaic_0001>
module attributes {stable_mosaic.version = 11 : i64} {
  func.func @transformer_block_kernel(%arg0: i32, %arg1: memref<32x32xf32, #tpu.memory_space<vmem>>, %arg2: memref<16x16xf32, #tpu.memory_space<vmem>>, %arg3: memref<352x128xf32, #tpu.memory_space<vmem>>, %arg4: memref<32x32xf32, #tpu.memory_space<vmem>>) attributes {dimension_semantics = [#tpu.dimension_semantics<arbitrary>], iteration_bounds = array<i64: 1>, scalar_prefetch = 0 : i64, scratch_operands = 0 : i64, tpu.core_type = #tpu.core_type<tc>, window_params = [{pipeline_mode = #tpu.pipeline_mode<synchronous>, transform_indices = @transform_0, window_bounds = array<i64: 32, 32>}, {pipeline_mode = #tpu.pipeline_mode<synchronous>, transform_indices = @transform_1, window_bounds = array<i64: 16, 16>}, {pipeline_mode = #tpu.pipeline_mode<synchronous>, transform_indices = @transform_2, window_bounds = array<i64: 352, 128>}, {pipeline_mode = #tpu.pipeline_mode<synchronous>, transform_indices = @transform_3, window_bounds = array<i64: 32, 32>}]} {
    %c0 = arith.constant 0 : index
    %c0_0 = arith.constant 0 : index
    %0 = vector.load %arg1[%c0, %c0_0] : memref<32x32xf32, #tpu.memory_space<vmem>>, vector<32x32xf32>
    %c0_1 = arith.constant 0 : index
    %c0_2 = arith.constant 0 : index
    %1 = vector.load %arg2[%c0_1, %c0_2] : memref<16x16xf32, #tpu.memory_space<vmem>>, vector<16x16xf32>
    %c0_3 = arith.constant 0 : index
    %c0_4 = arith.constant 0 : index
    %2 = vector.load %arg3[%c0_3, %c0_4] : memref<352x128xf32, #tpu.memory_space<vmem>>, vector<32x96xf32>
    %c32 = arith.constant 32 : index
    %c0_5 = arith.constant 0 : index
    %3 = vector.load %arg3[%c32, %c0_5] : memref<352x128xf32, #tpu.memory_space<vmem>>, vector<32x32xf32>
    %c64 = arith.constant 64 : index
    %c0_6 = arith.constant 0 : index
    %4 = vector.load %arg3[%c64, %c0_6] : memref<352x128xf32, #tpu.memory_space<vmem>>, vector<32x32xf32>
    %c96 = arith.constant 96 : index
    %c0_7 = arith.constant 0 : index
    %5 = vector.load %arg3[%c96, %c0_7] : memref<352x128xf32, #tpu.memory_space<vmem>>, vector<16x64xf32>
    %c112 = arith.constant 112 : index
    %c0_8 = arith.constant 0 : index
    %6 = vector.load %arg3[%c112, %c0_8] : memref<352x128xf32, #tpu.memory_space<vmem>>, vector<32x32xf32>
    %c144 = arith.constant 144 : index
    %c0_9 = arith.constant 0 : index
    %7 = vector.load %arg3[%c144, %c0_9] : memref<352x128xf32, #tpu.memory_space<vmem>>, vector<32x128xf32>
    %c176 = arith.constant 176 : index
    %c0_10 = arith.constant 0 : index
    %8 = vector.load %arg3[%c176, %c0_10] : memref<352x128xf32, #tpu.memory_space<vmem>>, vector<32x128xf32>
    %c208 = arith.constant 208 : index
    %c0_11 = arith.constant 0 : index
    %9 = vector.load %arg3[%c208, %c0_11] : memref<352x128xf32, #tpu.memory_space<vmem>>, vector<128x32xf32>
    %c336 = arith.constant 336 : index
    %c0_12 = arith.constant 0 : index
    %10 = vector.load %arg3[%c336, %c0_12] : memref<352x128xf32, #tpu.memory_space<vmem>>, vector<1x32xf32>
    %c337 = arith.constant 337 : index
    %c0_13 = arith.constant 0 : index
    %11 = vector.load %arg3[%c337, %c0_13] : memref<352x128xf32, #tpu.memory_space<vmem>>, vector<1x32xf32>
    %c338 = arith.constant 338 : index
    %c0_14 = arith.constant 0 : index
    %12 = vector.load %arg3[%c338, %c0_14] : memref<352x128xf32, #tpu.memory_space<vmem>>, vector<1x32xf32>
    %c339 = arith.constant 339 : index
    %c0_15 = arith.constant 0 : index
    %13 = vector.load %arg3[%c339, %c0_15] : memref<352x128xf32, #tpu.memory_space<vmem>>, vector<1x32xf32>
    %c340 = arith.constant 340 : index
    %c0_16 = arith.constant 0 : index
    %14 = vector.load %arg3[%c340, %c0_16] : memref<352x128xf32, #tpu.memory_space<vmem>>, vector<1x32xf32>
    %c341 = arith.constant 341 : index
    %c0_17 = arith.constant 0 : index
    %15 = vector.load %arg3[%c341, %c0_17] : memref<352x128xf32, #tpu.memory_space<vmem>>, vector<1x32xf32>
    %c342 = arith.constant 342 : index
    %c0_18 = arith.constant 0 : index
    %16 = vector.load %arg3[%c342, %c0_18] : memref<352x128xf32, #tpu.memory_space<vmem>>, vector<1x32xf32>
    %c343 = arith.constant 343 : index
    %c0_19 = arith.constant 0 : index
    %17 = vector.load %arg3[%c343, %c0_19] : memref<352x128xf32, #tpu.memory_space<vmem>>, vector<1x32xf32>
    %c344 = arith.constant 344 : index
    %c0_20 = arith.constant 0 : index
    %18 = vector.load %arg3[%c344, %c0_20] : memref<352x128xf32, #tpu.memory_space<vmem>>, vector<1x128xf32>
    %c345 = arith.constant 345 : index
    %c0_21 = arith.constant 0 : index
    %19 = vector.load %arg3[%c345, %c0_21] : memref<352x128xf32, #tpu.memory_space<vmem>>, vector<1x128xf32>
    %c346 = arith.constant 346 : index
    %c0_22 = arith.constant 0 : index
    %20 = vector.load %arg3[%c346, %c0_22] : memref<352x128xf32, #tpu.memory_space<vmem>>, vector<1x32xf32>
    %21 = tpu.iota {dimensions = array<i32: 0>} : vector<32x32xi32>
    %c4_i32 = arith.constant 4 : i32
    %22 = vector.broadcast %c4_i32 : i32 to vector<32x32xi32>
    %23 = arith.shrui %21, %22 : vector<32x32xi32>
    %24 = tpu.iota {dimensions = array<i32: 1>} : vector<32x32xi32>
    %c4_i32_23 = arith.constant 4 : i32
    %25 = vector.broadcast %c4_i32_23 : i32 to vector<32x32xi32>
    %26 = arith.shrui %24, %25 : vector<32x32xi32>
    %27 = arith.cmpi eq, %23, %26 : vector<32x32xi32>
    %28 = tpu.iota {dimensions = array<i32: 0>} : vector<32x16xi32>
    %c4_i32_24 = arith.constant 4 : i32
    %29 = vector.broadcast %c4_i32_24 : i32 to vector<32x16xi32>
    %30 = arith.shrui %28, %29 : vector<32x16xi32>
    %31 = tpu.iota {dimensions = array<i32: 1>} : vector<32x16xi32>
    %c3_i32 = arith.constant 3 : i32
    %32 = vector.broadcast %c3_i32 : i32 to vector<32x16xi32>
    %33 = arith.shrui %31, %32 : vector<32x16xi32>
    %34 = arith.cmpi eq, %30, %33 : vector<32x16xi32>
    %cst = arith.constant dense<0.000000e+00> : vector<32xf32>
    %35 = vector.multi_reduction <add>, %0, %cst [1] : vector<32x32xf32> to vector<32xf32>
    %36 = vector.shape_cast %35 : vector<32xf32> to vector<32x1xf32>
    %cst_25 = arith.constant 3.200000e+01 : f32
    %37 = vector.broadcast %cst_25 : f32 to vector<32x1xf32>
    %38 = arith.divf %36, %37 : vector<32x1xf32>
    %39 = vector.broadcast %38 : vector<32x1xf32> to vector<32x32xf32>
    %40 = arith.subf %0, %39 : vector<32x32xf32>
    %41 = arith.mulf %40, %40 : vector<32x32xf32>
    %cst_26 = arith.constant dense<0.000000e+00> : vector<32xf32>
    %42 = vector.multi_reduction <add>, %41, %cst_26 [1] : vector<32x32xf32> to vector<32xf32>
    %43 = vector.shape_cast %42 : vector<32xf32> to vector<32x1xf32>
    %cst_27 = arith.constant 3.200000e+01 : f32
    %44 = vector.broadcast %cst_27 : f32 to vector<32x1xf32>
    %45 = arith.divf %43, %44 : vector<32x1xf32>
    %46 = vector.broadcast %38 : vector<32x1xf32> to vector<32x32xf32>
    %47 = arith.subf %0, %46 : vector<32x32xf32>
    %cst_28 = arith.constant 9.99999974E-6 : f32
    %48 = vector.broadcast %cst_28 : f32 to vector<32x1xf32>
    %49 = arith.addf %45, %48 : vector<32x1xf32>
    %50 = math.rsqrt %49 : vector<32x1xf32>
    %51 = vector.broadcast %50 : vector<32x1xf32> to vector<32x32xf32>
    %52 = arith.mulf %47, %51 : vector<32x32xf32>
    %53 = vector.broadcast %10 : vector<1x32xf32> to vector<32x32xf32>
    %54 = arith.mulf %52, %53 : vector<32x32xf32>
    %55 = vector.broadcast %11 : vector<1x32xf32> to vector<32x32xf32>
    %56 = arith.addf %54, %55 : vector<32x32xf32>
    %cst_29 = arith.constant dense<0.000000e+00> : vector<32x96xf32>
    %57 = tpu.matmul %56, %2, %cst_29 {dimension_numbers = #tpu.dot_dimension_numbers<[1], [0], [0], [1], [0, 0, 1, 1], [], []>} : vector<32x32xf32>, vector<32x96xf32>, vector<32x96xf32> -> vector<32x96xf32>
    %58 = vector.extract_strided_slice %57 {offsets = [0, 0], sizes = [32, 32], strides = [1, 1]} : vector<32x96xf32> to vector<32x32xf32>
    %cst_30 = arith.constant 0.353553385 : f32
    %59 = vector.broadcast %cst_30 : f32 to vector<32x32xf32>
    %60 = arith.mulf %58, %59 : vector<32x32xf32>
    %61 = vector.extract_strided_slice %57 {offsets = [0, 32], sizes = [32, 32], strides = [1, 1]} : vector<32x96xf32> to vector<32x32xf32>
    %62 = vector.extract_strided_slice %57 {offsets = [0, 64], sizes = [32, 32], strides = [1, 1]} : vector<32x96xf32> to vector<32x32xf32>
    %63 = vector.extract_strided_slice %60 {offsets = [0, 0], sizes = [32, 8], strides = [1, 1]} : vector<32x32xf32> to vector<32x8xf32>
    %64 = vector.extract_strided_slice %61 {offsets = [0, 0], sizes = [32, 8], strides = [1, 1]} : vector<32x32xf32> to vector<32x8xf32>
    %cst_31 = arith.constant dense<0.000000e+00> : vector<32x32xf32>
    %65 = tpu.matmul %63, %64, %cst_31 {dimension_numbers = #tpu.dot_dimension_numbers<[1], [1], [0], [0], [0, 0, 1, 0], [], []>} : vector<32x8xf32>, vector<32x8xf32>, vector<32x32xf32> -> vector<32x32xf32>
    %66 = vector.extract_strided_slice %60 {offsets = [0, 8], sizes = [32, 8], strides = [1, 1]} : vector<32x32xf32> to vector<32x8xf32>
    %67 = vector.extract_strided_slice %61 {offsets = [0, 8], sizes = [32, 8], strides = [1, 1]} : vector<32x32xf32> to vector<32x8xf32>
    %cst_32 = arith.constant dense<0.000000e+00> : vector<32x32xf32>
    %68 = tpu.matmul %66, %67, %cst_32 {dimension_numbers = #tpu.dot_dimension_numbers<[1], [1], [0], [0], [0, 0, 1, 0], [], []>} : vector<32x8xf32>, vector<32x8xf32>, vector<32x32xf32> -> vector<32x32xf32>
    %69 = vector.extract_strided_slice %60 {offsets = [0, 16], sizes = [32, 8], strides = [1, 1]} : vector<32x32xf32> to vector<32x8xf32>
    %70 = vector.extract_strided_slice %61 {offsets = [0, 16], sizes = [32, 8], strides = [1, 1]} : vector<32x32xf32> to vector<32x8xf32>
    %cst_33 = arith.constant dense<0.000000e+00> : vector<32x32xf32>
    %71 = tpu.matmul %69, %70, %cst_33 {dimension_numbers = #tpu.dot_dimension_numbers<[1], [1], [0], [0], [0, 0, 1, 0], [], []>} : vector<32x8xf32>, vector<32x8xf32>, vector<32x32xf32> -> vector<32x32xf32>
    %72 = vector.extract_strided_slice %60 {offsets = [0, 24], sizes = [32, 8], strides = [1, 1]} : vector<32x32xf32> to vector<32x8xf32>
    %73 = vector.extract_strided_slice %61 {offsets = [0, 24], sizes = [32, 8], strides = [1, 1]} : vector<32x32xf32> to vector<32x8xf32>
    %cst_34 = arith.constant dense<0.000000e+00> : vector<32x32xf32>
    %74 = tpu.matmul %72, %73, %cst_34 {dimension_numbers = #tpu.dot_dimension_numbers<[1], [1], [0], [0], [0, 0, 1, 0], [], []>} : vector<32x8xf32>, vector<32x8xf32>, vector<32x32xf32> -> vector<32x32xf32>
    %75 = vector.shape_cast %65 : vector<32x32xf32> to vector<1x32x32xf32>
    %76 = vector.shape_cast %68 : vector<32x32xf32> to vector<1x32x32xf32>
    %77 = vector.shape_cast %71 : vector<32x32xf32> to vector<1x32x32xf32>
    %78 = vector.shape_cast %74 : vector<32x32xf32> to vector<1x32x32xf32>
    %79 = tpu.concatenate %75, %76, %77, %78 in 0 : vector<1x32x32xf32>, vector<1x32x32xf32>, vector<1x32x32xf32>, vector<1x32x32xf32> -> vector<4x32x32xf32>
    %80 = vector.shape_cast %27 : vector<32x32xi1> to vector<1x32x32xi1>
    %cst_35 = arith.constant -1.000000e+30 : f32
    %81 = vector.shape_cast %80 : vector<1x32x32xi1> to vector<1x32x32xi1>
    %82 = vector.broadcast %81 : vector<1x32x32xi1> to vector<4x32x32xi1>
    %83 = vector.broadcast %cst_35 : f32 to vector<4x32x32xf32>
    %84 = arith.select %82, %79, %83 : vector<4x32x32xi1>, vector<4x32x32xf32>
    %cst_36 = arith.constant dense<0xFF800000> : vector<4x32xf32>
    %85 = vector.multi_reduction <maximumf>, %84, %cst_36 [2] : vector<4x32x32xf32> to vector<4x32xf32>
    %86 = vector.shape_cast %85 : vector<4x32xf32> to vector<4x32x1xf32>
    %87 = vector.broadcast %86 : vector<4x32x1xf32> to vector<4x32x32xf32>
    %88 = arith.subf %84, %87 : vector<4x32x32xf32>
    %89 = math.exp %88 : vector<4x32x32xf32>
    %cst_37 = arith.constant dense<0.000000e+00> : vector<4x32xf32>
    %90 = vector.multi_reduction <add>, %89, %cst_37 [2] : vector<4x32x32xf32> to vector<4x32xf32>
    %91 = vector.shape_cast %90 : vector<4x32xf32> to vector<4x32x1xf32>
    %92 = tpu.reciprocal %91 {approx = true} : vector<4x32x1xf32> -> vector<4x32x1xf32>
    %93 = vector.broadcast %92 : vector<4x32x1xf32> to vector<4x32x32xf32>
    %94 = arith.mulf %89, %93 : vector<4x32x32xf32>
    %95 = vector.extract_strided_slice %62 {offsets = [0, 0], sizes = [32, 8], strides = [1, 1]} : vector<32x32xf32> to vector<32x8xf32>
    %96 = vector.extract_strided_slice %94 {offsets = [0, 0, 0], sizes = [1, 32, 32], strides = [1, 1, 1]} : vector<4x32x32xf32> to vector<1x32x32xf32>
    %97 = vector.shape_cast %96 : vector<1x32x32xf32> to vector<32x32xf32>
    %cst_38 = arith.constant dense<0.000000e+00> : vector<32x8xf32>
    %98 = tpu.matmul %97, %95, %cst_38 {dimension_numbers = #tpu.dot_dimension_numbers<[1], [0], [0], [1], [0, 0, 1, 1], [], []>} : vector<32x32xf32>, vector<32x8xf32>, vector<32x8xf32> -> vector<32x8xf32>
    %99 = vector.extract_strided_slice %62 {offsets = [0, 8], sizes = [32, 8], strides = [1, 1]} : vector<32x32xf32> to vector<32x8xf32>
    %100 = vector.extract_strided_slice %94 {offsets = [1, 0, 0], sizes = [1, 32, 32], strides = [1, 1, 1]} : vector<4x32x32xf32> to vector<1x32x32xf32>
    %101 = vector.shape_cast %100 : vector<1x32x32xf32> to vector<32x32xf32>
    %cst_39 = arith.constant dense<0.000000e+00> : vector<32x8xf32>
    %102 = tpu.matmul %101, %99, %cst_39 {dimension_numbers = #tpu.dot_dimension_numbers<[1], [0], [0], [1], [0, 0, 1, 1], [], []>} : vector<32x32xf32>, vector<32x8xf32>, vector<32x8xf32> -> vector<32x8xf32>
    %103 = vector.extract_strided_slice %62 {offsets = [0, 16], sizes = [32, 8], strides = [1, 1]} : vector<32x32xf32> to vector<32x8xf32>
    %104 = vector.extract_strided_slice %94 {offsets = [2, 0, 0], sizes = [1, 32, 32], strides = [1, 1, 1]} : vector<4x32x32xf32> to vector<1x32x32xf32>
    %105 = vector.shape_cast %104 : vector<1x32x32xf32> to vector<32x32xf32>
    %cst_40 = arith.constant dense<0.000000e+00> : vector<32x8xf32>
    %106 = tpu.matmul %105, %103, %cst_40 {dimension_numbers = #tpu.dot_dimension_numbers<[1], [0], [0], [1], [0, 0, 1, 1], [], []>} : vector<32x32xf32>, vector<32x8xf32>, vector<32x8xf32> -> vector<32x8xf32>
    %107 = vector.extract_strided_slice %62 {offsets = [0, 24], sizes = [32, 8], strides = [1, 1]} : vector<32x32xf32> to vector<32x8xf32>
    %108 = vector.extract_strided_slice %94 {offsets = [3, 0, 0], sizes = [1, 32, 32], strides = [1, 1, 1]} : vector<4x32x32xf32> to vector<1x32x32xf32>
    %109 = vector.shape_cast %108 : vector<1x32x32xf32> to vector<32x32xf32>
    %cst_41 = arith.constant dense<0.000000e+00> : vector<32x8xf32>
    %110 = tpu.matmul %109, %107, %cst_41 {dimension_numbers = #tpu.dot_dimension_numbers<[1], [0], [0], [1], [0, 0, 1, 1], [], []>} : vector<32x32xf32>, vector<32x8xf32>, vector<32x8xf32> -> vector<32x8xf32>
    %111 = tpu.concatenate %98, %102, %106, %110 in 1 : vector<32x8xf32>, vector<32x8xf32>, vector<32x8xf32>, vector<32x8xf32> -> vector<32x32xf32>
    %cst_42 = arith.constant dense<0.000000e+00> : vector<32x32xf32>
    %112 = tpu.matmul %111, %3, %cst_42 {dimension_numbers = #tpu.dot_dimension_numbers<[1], [0], [0], [1], [0, 0, 1, 1], [], []>} : vector<32x32xf32>, vector<32x32xf32>, vector<32x32xf32> -> vector<32x32xf32>
    %113 = vector.broadcast %12 : vector<1x32xf32> to vector<32x32xf32>
    %114 = arith.addf %112, %113 : vector<32x32xf32>
    %115 = arith.addf %0, %114 : vector<32x32xf32>
    %cst_43 = arith.constant dense<0.000000e+00> : vector<32xf32>
    %116 = vector.multi_reduction <add>, %115, %cst_43 [1] : vector<32x32xf32> to vector<32xf32>
    %117 = vector.shape_cast %116 : vector<32xf32> to vector<32x1xf32>
    %cst_44 = arith.constant 3.200000e+01 : f32
    %118 = vector.broadcast %cst_44 : f32 to vector<32x1xf32>
    %119 = arith.divf %117, %118 : vector<32x1xf32>
    %120 = vector.broadcast %119 : vector<32x1xf32> to vector<32x32xf32>
    %121 = arith.subf %115, %120 : vector<32x32xf32>
    %122 = arith.mulf %121, %121 : vector<32x32xf32>
    %cst_45 = arith.constant dense<0.000000e+00> : vector<32xf32>
    %123 = vector.multi_reduction <add>, %122, %cst_45 [1] : vector<32x32xf32> to vector<32xf32>
    %124 = vector.shape_cast %123 : vector<32xf32> to vector<32x1xf32>
    %cst_46 = arith.constant 3.200000e+01 : f32
    %125 = vector.broadcast %cst_46 : f32 to vector<32x1xf32>
    %126 = arith.divf %124, %125 : vector<32x1xf32>
    %127 = vector.broadcast %119 : vector<32x1xf32> to vector<32x32xf32>
    %128 = arith.subf %115, %127 : vector<32x32xf32>
    %cst_47 = arith.constant 9.99999974E-6 : f32
    %129 = vector.broadcast %cst_47 : f32 to vector<32x1xf32>
    %130 = arith.addf %126, %129 : vector<32x1xf32>
    %131 = math.rsqrt %130 : vector<32x1xf32>
    %132 = vector.broadcast %131 : vector<32x1xf32> to vector<32x32xf32>
    %133 = arith.mulf %128, %132 : vector<32x32xf32>
    %134 = vector.broadcast %13 : vector<1x32xf32> to vector<32x32xf32>
    %135 = arith.mulf %133, %134 : vector<32x32xf32>
    %136 = vector.broadcast %14 : vector<1x32xf32> to vector<32x32xf32>
    %137 = arith.addf %135, %136 : vector<32x32xf32>
    %cst_48 = arith.constant dense<0.000000e+00> : vector<32x32xf32>
    %138 = tpu.matmul %137, %4, %cst_48 {dimension_numbers = #tpu.dot_dimension_numbers<[1], [0], [0], [1], [0, 0, 1, 1], [], []>} : vector<32x32xf32>, vector<32x32xf32>, vector<32x32xf32> -> vector<32x32xf32>
    %cst_49 = arith.constant 0.353553385 : f32
    %139 = vector.broadcast %cst_49 : f32 to vector<32x32xf32>
    %140 = arith.mulf %138, %139 : vector<32x32xf32>
    %cst_50 = arith.constant dense<0.000000e+00> : vector<16x64xf32>
    %141 = tpu.matmul %1, %5, %cst_50 {dimension_numbers = #tpu.dot_dimension_numbers<[1], [0], [0], [1], [0, 0, 1, 1], [], []>} : vector<16x16xf32>, vector<16x64xf32>, vector<16x64xf32> -> vector<16x64xf32>
    %142 = vector.extract_strided_slice %141 {offsets = [0, 0], sizes = [16, 32], strides = [1, 1]} : vector<16x64xf32> to vector<16x32xf32>
    %143 = vector.extract_strided_slice %141 {offsets = [0, 32], sizes = [16, 32], strides = [1, 1]} : vector<16x64xf32> to vector<16x32xf32>
    %144 = vector.extract_strided_slice %140 {offsets = [0, 0], sizes = [32, 8], strides = [1, 1]} : vector<32x32xf32> to vector<32x8xf32>
    %145 = vector.extract_strided_slice %142 {offsets = [0, 0], sizes = [16, 8], strides = [1, 1]} : vector<16x32xf32> to vector<16x8xf32>
    %cst_51 = arith.constant dense<0.000000e+00> : vector<32x16xf32>
    %146 = tpu.matmul %144, %145, %cst_51 {dimension_numbers = #tpu.dot_dimension_numbers<[1], [1], [0], [0], [0, 0, 1, 0], [], []>} : vector<32x8xf32>, vector<16x8xf32>, vector<32x16xf32> -> vector<32x16xf32>
    %147 = vector.extract_strided_slice %140 {offsets = [0, 8], sizes = [32, 8], strides = [1, 1]} : vector<32x32xf32> to vector<32x8xf32>
    %148 = vector.extract_strided_slice %142 {offsets = [0, 8], sizes = [16, 8], strides = [1, 1]} : vector<16x32xf32> to vector<16x8xf32>
    %cst_52 = arith.constant dense<0.000000e+00> : vector<32x16xf32>
    %149 = tpu.matmul %147, %148, %cst_52 {dimension_numbers = #tpu.dot_dimension_numbers<[1], [1], [0], [0], [0, 0, 1, 0], [], []>} : vector<32x8xf32>, vector<16x8xf32>, vector<32x16xf32> -> vector<32x16xf32>
    %150 = vector.extract_strided_slice %140 {offsets = [0, 16], sizes = [32, 8], strides = [1, 1]} : vector<32x32xf32> to vector<32x8xf32>
    %151 = vector.extract_strided_slice %142 {offsets = [0, 16], sizes = [16, 8], strides = [1, 1]} : vector<16x32xf32> to vector<16x8xf32>
    %cst_53 = arith.constant dense<0.000000e+00> : vector<32x16xf32>
    %152 = tpu.matmul %150, %151, %cst_53 {dimension_numbers = #tpu.dot_dimension_numbers<[1], [1], [0], [0], [0, 0, 1, 0], [], []>} : vector<32x8xf32>, vector<16x8xf32>, vector<32x16xf32> -> vector<32x16xf32>
    %153 = vector.extract_strided_slice %140 {offsets = [0, 24], sizes = [32, 8], strides = [1, 1]} : vector<32x32xf32> to vector<32x8xf32>
    %154 = vector.extract_strided_slice %142 {offsets = [0, 24], sizes = [16, 8], strides = [1, 1]} : vector<16x32xf32> to vector<16x8xf32>
    %cst_54 = arith.constant dense<0.000000e+00> : vector<32x16xf32>
    %155 = tpu.matmul %153, %154, %cst_54 {dimension_numbers = #tpu.dot_dimension_numbers<[1], [1], [0], [0], [0, 0, 1, 0], [], []>} : vector<32x8xf32>, vector<16x8xf32>, vector<32x16xf32> -> vector<32x16xf32>
    %156 = vector.shape_cast %146 : vector<32x16xf32> to vector<1x32x16xf32>
    %157 = vector.shape_cast %149 : vector<32x16xf32> to vector<1x32x16xf32>
    %158 = vector.shape_cast %152 : vector<32x16xf32> to vector<1x32x16xf32>
    %159 = vector.shape_cast %155 : vector<32x16xf32> to vector<1x32x16xf32>
    %160 = tpu.concatenate %156, %157, %158, %159 in 0 : vector<1x32x16xf32>, vector<1x32x16xf32>, vector<1x32x16xf32>, vector<1x32x16xf32> -> vector<4x32x16xf32>
    %161 = vector.shape_cast %34 : vector<32x16xi1> to vector<1x32x16xi1>
    %cst_55 = arith.constant -1.000000e+30 : f32
    %162 = vector.shape_cast %161 : vector<1x32x16xi1> to vector<1x32x16xi1>
    %163 = vector.broadcast %162 : vector<1x32x16xi1> to vector<4x32x16xi1>
    %164 = vector.broadcast %cst_55 : f32 to vector<4x32x16xf32>
    %165 = arith.select %163, %160, %164 : vector<4x32x16xi1>, vector<4x32x16xf32>
    %cst_56 = arith.constant dense<0xFF800000> : vector<4x32xf32>
    %166 = vector.multi_reduction <maximumf>, %165, %cst_56 [2] : vector<4x32x16xf32> to vector<4x32xf32>
    %167 = vector.shape_cast %166 : vector<4x32xf32> to vector<4x32x1xf32>
    %168 = vector.broadcast %167 : vector<4x32x1xf32> to vector<4x32x16xf32>
    %169 = arith.subf %165, %168 : vector<4x32x16xf32>
    %170 = math.exp %169 : vector<4x32x16xf32>
    %cst_57 = arith.constant dense<0.000000e+00> : vector<4x32xf32>
    %171 = vector.multi_reduction <add>, %170, %cst_57 [2] : vector<4x32x16xf32> to vector<4x32xf32>
    %172 = vector.shape_cast %171 : vector<4x32xf32> to vector<4x32x1xf32>
    %173 = tpu.reciprocal %172 {approx = true} : vector<4x32x1xf32> -> vector<4x32x1xf32>
    %174 = vector.broadcast %173 : vector<4x32x1xf32> to vector<4x32x16xf32>
    %175 = arith.mulf %170, %174 : vector<4x32x16xf32>
    %176 = vector.extract_strided_slice %143 {offsets = [0, 0], sizes = [16, 8], strides = [1, 1]} : vector<16x32xf32> to vector<16x8xf32>
    %177 = vector.extract_strided_slice %175 {offsets = [0, 0, 0], sizes = [1, 32, 16], strides = [1, 1, 1]} : vector<4x32x16xf32> to vector<1x32x16xf32>
    %178 = vector.shape_cast %177 : vector<1x32x16xf32> to vector<32x16xf32>
    %cst_58 = arith.constant dense<0.000000e+00> : vector<32x8xf32>
    %179 = tpu.matmul %178, %176, %cst_58 {dimension_numbers = #tpu.dot_dimension_numbers<[1], [0], [0], [1], [0, 0, 1, 1], [], []>} : vector<32x16xf32>, vector<16x8xf32>, vector<32x8xf32> -> vector<32x8xf32>
    %180 = vector.extract_strided_slice %143 {offsets = [0, 8], sizes = [16, 8], strides = [1, 1]} : vector<16x32xf32> to vector<16x8xf32>
    %181 = vector.extract_strided_slice %175 {offsets = [1, 0, 0], sizes = [1, 32, 16], strides = [1, 1, 1]} : vector<4x32x16xf32> to vector<1x32x16xf32>
    %182 = vector.shape_cast %181 : vector<1x32x16xf32> to vector<32x16xf32>
    %cst_59 = arith.constant dense<0.000000e+00> : vector<32x8xf32>
    %183 = tpu.matmul %182, %180, %cst_59 {dimension_numbers = #tpu.dot_dimension_numbers<[1], [0], [0], [1], [0, 0, 1, 1], [], []>} : vector<32x16xf32>, vector<16x8xf32>, vector<32x8xf32> -> vector<32x8xf32>
    %184 = vector.extract_strided_slice %143 {offsets = [0, 16], sizes = [16, 8], strides = [1, 1]} : vector<16x32xf32> to vector<16x8xf32>
    %185 = vector.extract_strided_slice %175 {offsets = [2, 0, 0], sizes = [1, 32, 16], strides = [1, 1, 1]} : vector<4x32x16xf32> to vector<1x32x16xf32>
    %186 = vector.shape_cast %185 : vector<1x32x16xf32> to vector<32x16xf32>
    %cst_60 = arith.constant dense<0.000000e+00> : vector<32x8xf32>
    %187 = tpu.matmul %186, %184, %cst_60 {dimension_numbers = #tpu.dot_dimension_numbers<[1], [0], [0], [1], [0, 0, 1, 1], [], []>} : vector<32x16xf32>, vector<16x8xf32>, vector<32x8xf32> -> vector<32x8xf32>
    %188 = vector.extract_strided_slice %143 {offsets = [0, 24], sizes = [16, 8], strides = [1, 1]} : vector<16x32xf32> to vector<16x8xf32>
    %189 = vector.extract_strided_slice %175 {offsets = [3, 0, 0], sizes = [1, 32, 16], strides = [1, 1, 1]} : vector<4x32x16xf32> to vector<1x32x16xf32>
    %190 = vector.shape_cast %189 : vector<1x32x16xf32> to vector<32x16xf32>
    %cst_61 = arith.constant dense<0.000000e+00> : vector<32x8xf32>
    %191 = tpu.matmul %190, %188, %cst_61 {dimension_numbers = #tpu.dot_dimension_numbers<[1], [0], [0], [1], [0, 0, 1, 1], [], []>} : vector<32x16xf32>, vector<16x8xf32>, vector<32x8xf32> -> vector<32x8xf32>
    %192 = tpu.concatenate %179, %183, %187, %191 in 1 : vector<32x8xf32>, vector<32x8xf32>, vector<32x8xf32>, vector<32x8xf32> -> vector<32x32xf32>
    %cst_62 = arith.constant dense<0.000000e+00> : vector<32x32xf32>
    %193 = tpu.matmul %192, %6, %cst_62 {dimension_numbers = #tpu.dot_dimension_numbers<[1], [0], [0], [1], [0, 0, 1, 1], [], []>} : vector<32x32xf32>, vector<32x32xf32>, vector<32x32xf32> -> vector<32x32xf32>
    %194 = vector.broadcast %15 : vector<1x32xf32> to vector<32x32xf32>
    %195 = arith.addf %193, %194 : vector<32x32xf32>
    %196 = arith.addf %115, %195 : vector<32x32xf32>
    %cst_63 = arith.constant dense<0.000000e+00> : vector<32xf32>
    %197 = vector.multi_reduction <add>, %196, %cst_63 [1] : vector<32x32xf32> to vector<32xf32>
    %198 = vector.shape_cast %197 : vector<32xf32> to vector<32x1xf32>
    %cst_64 = arith.constant 3.200000e+01 : f32
    %199 = vector.broadcast %cst_64 : f32 to vector<32x1xf32>
    %200 = arith.divf %198, %199 : vector<32x1xf32>
    %201 = vector.broadcast %200 : vector<32x1xf32> to vector<32x32xf32>
    %202 = arith.subf %196, %201 : vector<32x32xf32>
    %203 = arith.mulf %202, %202 : vector<32x32xf32>
    %cst_65 = arith.constant dense<0.000000e+00> : vector<32xf32>
    %204 = vector.multi_reduction <add>, %203, %cst_65 [1] : vector<32x32xf32> to vector<32xf32>
    %205 = vector.shape_cast %204 : vector<32xf32> to vector<32x1xf32>
    %cst_66 = arith.constant 3.200000e+01 : f32
    %206 = vector.broadcast %cst_66 : f32 to vector<32x1xf32>
    %207 = arith.divf %205, %206 : vector<32x1xf32>
    %208 = vector.broadcast %200 : vector<32x1xf32> to vector<32x32xf32>
    %209 = arith.subf %196, %208 : vector<32x32xf32>
    %cst_67 = arith.constant 9.99999974E-6 : f32
    %210 = vector.broadcast %cst_67 : f32 to vector<32x1xf32>
    %211 = arith.addf %207, %210 : vector<32x1xf32>
    %212 = math.rsqrt %211 : vector<32x1xf32>
    %213 = vector.broadcast %212 : vector<32x1xf32> to vector<32x32xf32>
    %214 = arith.mulf %209, %213 : vector<32x32xf32>
    %215 = vector.broadcast %16 : vector<1x32xf32> to vector<32x32xf32>
    %216 = arith.mulf %214, %215 : vector<32x32xf32>
    %217 = vector.broadcast %17 : vector<1x32xf32> to vector<32x32xf32>
    %218 = arith.addf %216, %217 : vector<32x32xf32>
    %cst_68 = arith.constant dense<0.000000e+00> : vector<32x128xf32>
    %219 = tpu.matmul %218, %7, %cst_68 {dimension_numbers = #tpu.dot_dimension_numbers<[1], [0], [0], [1], [0, 0, 1, 1], [], []>} : vector<32x32xf32>, vector<32x128xf32>, vector<32x128xf32> -> vector<32x128xf32>
    %220 = vector.broadcast %18 : vector<1x128xf32> to vector<32x128xf32>
    %221 = arith.addf %219, %220 : vector<32x128xf32>
    %cst_69 = arith.constant dense<0.000000e+00> : vector<32x128xf32>
    %222 = tpu.matmul %218, %8, %cst_69 {dimension_numbers = #tpu.dot_dimension_numbers<[1], [0], [0], [1], [0, 0, 1, 1], [], []>} : vector<32x32xf32>, vector<32x128xf32>, vector<32x128xf32> -> vector<32x128xf32>
    %223 = vector.broadcast %19 : vector<1x128xf32> to vector<32x128xf32>
    %224 = arith.addf %222, %223 : vector<32x128xf32>
    %cst_70 = arith.constant 5.000000e-01 : f32
    %225 = vector.broadcast %cst_70 : f32 to vector<32x128xf32>
    %226 = arith.mulf %225, %224 : vector<32x128xf32>
    %cst_71 = arith.constant 0.707106769 : f32
    %227 = vector.broadcast %cst_71 : f32 to vector<32x128xf32>
    %228 = arith.mulf %224, %227 : vector<32x128xf32>
    %229 = math.erf %228 : vector<32x128xf32>
    %cst_72 = arith.constant 1.000000e+00 : f32
    %230 = vector.broadcast %cst_72 : f32 to vector<32x128xf32>
    %231 = arith.addf %230, %229 : vector<32x128xf32>
    %232 = arith.mulf %226, %231 : vector<32x128xf32>
    %233 = arith.mulf %221, %232 : vector<32x128xf32>
    %cst_73 = arith.constant dense<0.000000e+00> : vector<32x32xf32>
    %234 = tpu.matmul %233, %9, %cst_73 {dimension_numbers = #tpu.dot_dimension_numbers<[1], [0], [0], [1], [0, 0, 1, 1], [], []>} : vector<32x128xf32>, vector<128x32xf32>, vector<32x32xf32> -> vector<32x32xf32>
    %235 = arith.addf %196, %234 : vector<32x32xf32>
    %236 = vector.broadcast %20 : vector<1x32xf32> to vector<32x32xf32>
    %237 = arith.addf %235, %236 : vector<32x32xf32>
    %c0_74 = arith.constant 0 : index
    %c0_75 = arith.constant 0 : index
    %238 = vector.load %arg4[%c0_74, %c0_75] : memref<32x32xf32, #tpu.memory_space<vmem>>, vector<32x32xf32>
    tpu.vector_store %arg4[%c0_74, %c0_75], %237 {strides = array<i32>} : memref<32x32xf32, #tpu.memory_space<vmem>>, vector<32x32xf32>,
    return
  }
  func.func @transform_0(%arg0: i32) -> (i32, i32) {
    %c0_i32 = arith.constant 0 : i32
    %c0_i32_0 = arith.constant 0 : i32
    %c0_i32_1 = arith.constant 0 : i32
    return %c0_i32, %c0_i32_0 : i32, i32
  }
  func.func @transform_1(%arg0: i32) -> (i32, i32) {
    %c0_i32 = arith.constant 0 : i32
    %c0_i32_0 = arith.constant 0 : i32
    %c0_i32_1 = arith.constant 0 : i32
    return %c0_i32, %c0_i32_0 : i32, i32
  }
  func.func @transform_2(%arg0: i32) -> (i32, i32) {
    %c0_i32 = arith.constant 0 : i32
    %c0_i32_0 = arith.constant 0 : i32
    %c0_i32_1 = arith.constant 0 : i32
    return %c0_i32, %c0_i32_0 : i32, i32
  }
  func.func @transform_3(%arg0: i32) -> (i32, i32) {
    %c0_i32 = arith.constant 0 : i32
    %c0_i32_0 = arith.constant 0 : i32
    %c0_i32_1 = arith.constant 0 : i32
    return %c0_i32, %c0_i32_0 : i32, i32
  }
}

</mosaic_0001>

<llo_original>
// kernel: basic_transformer_block.1
$region0: #{basic_transformer_block.1}
  #allocation0 [shape = 'u32[]', space=smem, size = 0x4, offset = 0x4, fixed_abs, tag = 'smem constant byte address 0x4 - core index']
  #allocation1 [shape = 'u32[72,128]{1,0:T(1,128)}', space=vmem, size = 0x9000, scoped, tag = 'internal scratch']
  %s0 = inlined_call_operand.vmem [shape: f32[32,32], index: 0, kind: input, shape index: {}]
  %s1 = inlined_call_operand.vmem [shape: f32[16,16], index: 1, kind: input, shape index: {}]
  %s2 = inlined_call_operand.vmem [shape: f32[352,128], index: 2, kind: input, shape index: {}]
  %s3 = inlined_call_operand.hbm [shape: f32[32,32], index: 3, kind: output, shape index: {}]
  %s4 = sld [smem:[#allocation0]]
  $region22: #{basic_transformer_block.1} parent=0
    _
  %s6 = ssub.s32 1, %s4
  %s7 = scalar_select 0, %s6, %s4
  $region1: #{basic_transformer_block.1} parent=0
    #allocation2 [shape = 'u8[16384]{0}', space=vmem, size = 0x4000, scoped, tag = 'output window, operand 0, single buffered']
    #allocation3 [shape = 's32[1]{0}', space=sflag, size = 0x4, scoped, tag = 'scoped memory for basic_transformer_block.1']
    %8 = vsyncpa [#allocation3], 0
    // Predicated region
    $region2: #{basic_transformer_block.1} parent=1 // pred_check
      _
    $region3: #{basic_transformer_block.1} parent=1 // pred_check_branch
      %10 = sbr.rel (0) target = $region5
    $region4: #{basic_transformer_block.1} parent=1 // pred_region
      _
    $region5: #{basic_transformer_block.1} parent=1 // pred_fallthru
      _
    // Predicated region
    $region6: #{basic_transformer_block.1} parent=1 // pred_check
      _
    $region7: #{basic_transformer_block.1} parent=1 // pred_check_branch
      %12 = sbr.rel (0) target = $region9
    $region8: #{basic_transformer_block.1} parent=1 // pred_region
      _
    $region9: #{basic_transformer_block.1} parent=1 // pred_fallthru
      _
    // Predicated region
    $region10: #{basic_transformer_block.1} parent=1 // pred_check
      _
    $region11: #{basic_transformer_block.1} parent=1 // pred_check_branch
      %14 = sbr.rel (0) target = $region13
    $region12: #{basic_transformer_block.1} parent=1 // pred_region
      _
    $region13: #{basic_transformer_block.1} parent=1 // pred_fallthru
      _
    %v15 = vld [vmem:[%s0] sm:$0xff]
    %v16 = vld [vmem:[%s0 + $0x8] sm:$0xff]
    %v17 = vld [vmem:[%s0 + $0x10] sm:$0xff]
    %v18 = vld [vmem:[%s0 + $0x18] sm:$0xff]
    %v19 = vld [vmem:[%s1] sm:$0xff]
    %v20 = vld [vmem:[%s1 + $0x8] sm:$0xff]
    %v21 = vld [vmem:[%s2] sm:$0xff]
    %v22 = vld [vmem:[%s2 + $0x8] sm:$0xff]
    %v23 = vld [vmem:[%s2 + $0x10] sm:$0xff]
    %v24 = vld [vmem:[%s2 + $0x18] sm:$0xff]
    %v25 = vld [vmem:[%s2 + $0x20] sm:$0xff]
    %v26 = vld [vmem:[%s2 + $0x28] sm:$0xff]
    %v27 = vld [vmem:[%s2 + $0x30] sm:$0xff]
    %v28 = vld [vmem:[%s2 + $0x38] sm:$0xff]
    %v29 = vld [vmem:[%s2 + $0x40] sm:$0xff]
    %v30 = vld [vmem:[%s2 + $0x48] sm:$0xff]
    %v31 = vld [vmem:[%s2 + $0x50] sm:$0xff]
    %v32 = vld [vmem:[%s2 + $0x58] sm:$0xff]
    %v33 = vld [vmem:[%s2 + $0x60] sm:$0xff]
    %v34 = vld [vmem:[%s2 + $0x68] sm:$0xff]
    %v35 = vld [vmem:[%s2 + $0x70] sm:$0xff]
    %v36 = vld [vmem:[%s2 + $0x78] sm:$0xff]
    %v37 = vld [vmem:[%s2 + $0x80] sm:$0xff]
    %v38 = vld [vmem:[%s2 + $0x88] sm:$0xff]
    %v39 = vld [vmem:[%s2 + $0x90] sm:$0xff]
    %v40 = vld [vmem:[%s2 + $0x98] sm:$0xff]
    %v41 = vld [vmem:[%s2 + $0xa0] sm:$0xff]
    %v42 = vld [vmem:[%s2 + $0xa8] sm:$0xff]
    %v43 = vld [vmem:[%s2 + $0xb0] sm:$0xff]
    %v44 = vld [vmem:[%s2 + $0xb8] sm:$0xff]
    %v45 = vld [vmem:[%s2 + $0xc0] sm:$0xff]
    %v46 = vld [vmem:[%s2 + $0xc8] sm:$0xff]
    %v47 = vld [vmem:[%s2 + $0xd0] sm:$0xff]
    %v48 = vld [vmem:[%s2 + $0xd8] sm:$0xff]
    %v49 = vld [vmem:[%s2 + $0xe0] sm:$0xff]
    %v50 = vld [vmem:[%s2 + $0xe8] sm:$0xff]
    %v51 = vld [vmem:[%s2 + $0xf0] sm:$0xff]
    %v52 = vld [vmem:[%s2 + $0xf8] sm:$0xff]
    %v53 = vld [vmem:[%s2 + $0x100] sm:$0xff]
    %v54 = vld [vmem:[%s2 + $0x108] sm:$0xff]
    %v55 = vld [vmem:[%s2 + $0x110] sm:$0xff]
    %v56 = vld [vmem:[%s2 + $0x118] sm:$0xff]
    %v57 = vld [vmem:[%s2 + $0x120] sm:$0xff]
    %v58 = vld [vmem:[%s2 + $0x128] sm:$0xff]
    %v59 = vld [vmem:[%s2 + $0x130] sm:$0xff]
    %v60 = vld [vmem:[%s2 + $0x138] sm:$0xff]
    %v61 = vld [vmem:[%s2 + $0x140] sm:$0xff]
    %v62 = vld [vmem:[%s2 + $0x148] sm:$0xff]
    %v63 = vld [vmem:[%s2 + $0x150] sm:$0x1]
    %v64 = vld [vmem:[%s2 + $0x151] sm:$0x1]
    %v65 = vld [vmem:[%s2 + $0x152] sm:$0x1]
    %v66 = vld [vmem:[%s2 + $0x153] sm:$0x1]
    %v67 = vld [vmem:[%s2 + $0x154] sm:$0x1]
    %v68 = vld [vmem:[%s2 + $0x155] sm:$0x1]
    %v69 = vld [vmem:[%s2 + $0x156] sm:$0x1]
    %v70 = vld [vmem:[%s2 + $0x157] sm:$0x1]
    %v71 = vld [vmem:[%s2 + $0x158] sm:$0x1]
    %v72 = vld [vmem:[%s2 + $0x159] sm:$0x1]
    %v73 = vld [vmem:[%s2 + $0x15a] sm:$0x1]
    %v74 = vlaneseq
    %v75 = vshrl.u32 %v74, 7
    %v76 = vadd.s32 %v75, 8
    %v77 = vadd.s32 %v75, 16
    %v78 = vadd.s32 %v75, 24
    %v79 = vshrl.u32 %v75, 4
    %v80 = vshrl.u32 %v76, 4
    %v81 = vshrl.u32 %v77, 4
    %v82 = vshrl.u32 %v78, 4
    %v83 = vlaneseq
    %v84 = vand.u32 %v83, 127
    %v85 = vshrl.u32 %v84, 4
    %vm86 = vcmp.eq.s32.totalorder %v79, %v85
    %vm87 = vcmp.eq.s32.totalorder %v80, %v85
    %vm88 = vcmp.eq.s32.totalorder %v81, %v85
    %vm89 = vcmp.eq.s32.totalorder %v82, %v85
    %v90 = vshrl.u32 %v84, 3
    %vm91 = vcmp.eq.s32.totalorder %v79, %v90
    %vm92 = vcmp.eq.s32.totalorder %v80, %v90
    %vm93 = vcmp.eq.s32.totalorder %v81, %v90
    %vm94 = vcmp.eq.s32.totalorder %v82, %v90
    %vm95 = vcmask 261120
    %v96 = vsel %vm95, %v15, 0.0
    %97 = vadd.xlane.f32.xlu0 %v96
    %v98 = vpop.xlane.xlu0 %97
    %v99 = vsel %vm95, %v16, 0.0
    %100 = vadd.xlane.f32.xlu0 %v99
    %v101 = vpop.xlane.xlu0 %100
    %v102 = vsel %vm95, %v17, 0.0
    %103 = vadd.xlane.f32.xlu0 %v102
    %v104 = vpop.xlane.xlu0 %103
    %v105 = vsel %vm95, %v18, 0.0
    %106 = vadd.xlane.f32.xlu0 %v105
    %v107 = vpop.xlane.xlu0 %106
    %v108 = vrcp.pop 32.0
    %v109 = vmul.f32 32.0, %v108
    %v110 = vsub.f32 1.0, %v109
    %v111 = vmul.f32 %v108, %v110
    %v112 = vadd.f32 %v108, %v111
    %vm113 = vweird.f32 %v108
    %v114 = vsel %vm113, %v108, %v112
    %v115 = vmul.f32 %v98, %v114
    %v116 = vmul.f32 %v101, %v114
    %v117 = vmul.f32 %v104, %v114
    %v118 = vmul.f32 %v107, %v114
    %v119 = vsub.f32 %v15, %v115
    %v120 = vsub.f32 %v16, %v116
    %v121 = vsub.f32 %v17, %v117
    %v122 = vsub.f32 %v18, %v118
    %v123 = vmul.f32 %v119, %v119
    %v124 = vmul.f32 %v120, %v120
    %v125 = vmul.f32 %v121, %v121
    %v126 = vmul.f32 %v122, %v122
    %v127 = vsel %vm95, %v123, 0.0
    %128 = vadd.xlane.f32.xlu0 %v127
    %v129 = vpop.xlane.xlu0 %128
    %v130 = vsel %vm95, %v124, 0.0
    %131 = vadd.xlane.f32.xlu0 %v130
    %v132 = vpop.xlane.xlu0 %131
    %v133 = vsel %vm95, %v125, 0.0
    %134 = vadd.xlane.f32.xlu0 %v133
    %v135 = vpop.xlane.xlu0 %134
    %v136 = vsel %vm95, %v126, 0.0
    %137 = vadd.xlane.f32.xlu0 %v136
    %v138 = vpop.xlane.xlu0 %137
    %v139 = vmul.f32 %v129, %v114
    %v140 = vmul.f32 %v132, %v114
    %v141 = vmul.f32 %v135, %v114
    %v142 = vmul.f32 %v138, %v114
    %v143 = vadd.f32 %v139, 1e-05
    %v144 = vadd.f32 %v140, 1e-05
    %v145 = vadd.f32 %v141, 1e-05
    %v146 = vadd.f32 %v142, 1e-05
    %v147 = vrsqrt.pop %v143
    %v148 = vmul.f32 %v147, %v143
    %v149 = vmul.f32 %v148, %v147
    %v150 = vmul.f32 0.5, %v149
    %v151 = vsub.f32 1.5, %v150
    %v152 = vmul.f32 %v147, %v151
    %vm153 = vweird.f32 %v143
    %vm154 = vweird.f32 %v147
    %vm155 = vmor %vm153, %vm154
    %v156 = vsel %vm155, %v147, %v152
    %v157 = vrsqrt.pop %v144
    %v158 = vmul.f32 %v157, %v144
    %v159 = vmul.f32 %v158, %v157
    %v160 = vmul.f32 0.5, %v159
    %v161 = vsub.f32 1.5, %v160
    %v162 = vmul.f32 %v157, %v161
    %vm163 = vweird.f32 %v144
    %vm164 = vweird.f32 %v157
    %vm165 = vmor %vm163, %vm164
    %v166 = vsel %vm165, %v157, %v162
    %v167 = vrsqrt.pop %v145
    %v168 = vmul.f32 %v167, %v145
    %v169 = vmul.f32 %v168, %v167
    %v170 = vmul.f32 0.5, %v169
    %v171 = vsub.f32 1.5, %v170
    %v172 = vmul.f32 %v167, %v171
    %vm173 = vweird.f32 %v145
    %vm174 = vweird.f32 %v167
    %vm175 = vmor %vm173, %vm174
    %v176 = vsel %vm175, %v167, %v172
    %v177 = vrsqrt.pop %v146
    %v178 = vmul.f32 %v177, %v146
    %v179 = vmul.f32 %v178, %v177
    %v180 = vmul.f32 0.5, %v179
    %v181 = vsub.f32 1.5, %v180
    %v182 = vmul.f32 %v177, %v181
    %vm183 = vweird.f32 %v146
    %vm184 = vweird.f32 %v177
    %vm185 = vmor %vm183, %vm184
    %v186 = vsel %vm185, %v177, %v182
    %v187 = vmul.f32 %v119, %v156
    %v188 = vmul.f32 %v120, %v166
    %v189 = vmul.f32 %v121, %v176
    %v190 = vmul.f32 %v122, %v186
    %v191 = vperm.slane %v63, 0
    %v192 = vmul.f32 %v187, %v191
    %v193 = vmul.f32 %v188, %v191
    %v194 = vmul.f32 %v189, %v191
    %v195 = vmul.f32 %v190, %v191
    %v196 = vperm.slane %v64, 0
    %v197 = vadd.f32 %v192, %v196
    %v198 = vadd.f32 %v193, %v196
    %v199 = vadd.f32 %v194, %v196
    %v200 = vadd.f32 %v195, %v196
    %v202 = vsel %vm95, %v197, 0
    %v205 = vsel %vm95, %v198, 0
    %v208 = vsel %vm95, %v199, 0
    %v211 = vsel %vm95, %v200, 0
    %213 = vmatpush.msra.mxu0 0.0
    %214 = vmatpush.msra.mxu0 0.0
    %215 = vmatpush.msra.mxu0 0.0
    %216 = vmatpush.msra.mxu0 0.0
    %217 = vmatpush.msra.mxu0 0.0
    %218 = vmatpush.msra.mxu0 0.0
    %219 = vmatpush.msra.mxu0 0.0
    %220 = vmatpush.msra.mxu0 0.0
    %221 = vmatpush.msra.mxu0 0.0
    %222 = vmatpush.msra.mxu0 0.0
    %223 = vmatpush.msra.mxu0 0.0
    %224 = vmatpush.msra.mxu0 0.0
    %225 = vmatpush.msra.mxu0 %v24
    %226 = vmatpush.msra.mxu0 %v23
    %227 = vmatpush.msra.mxu0 %v22
    %228 = vmatpush.msra.mxu0 %v21
    %229 = vmatmul.f32.gmra.mxu0 %v202
    %v230 = vpop.f32.mrf.mxu0
    %v231 = vadd.f32 0.0, %v230
    %232 = vmatmul.f32.gmra.mxu0 %v205
    %v233 = vpop.f32.mrf.mxu0
    %v234 = vadd.f32 0.0, %v233
    %235 = vmatmul.f32.gmra.mxu0 %v208
    %v236 = vpop.f32.mrf.mxu0
    %v237 = vadd.f32 0.0, %v236
    %238 = vmatmul.f32.gmra.mxu0 %v211
    %v239 = vpop.f32.mrf.mxu0
    %v240 = vadd.f32 0.0, %v239
    %241 = vdwg.mxu0
    %v242 = vmul.f32 %v231, 0.35355338
    %v243 = vmul.f32 %v234, 0.35355338
    %v244 = vmul.f32 %v237, 0.35355338
    %v245 = vmul.f32 %v240, 0.35355338
    %250 = vrot.lane.b32.xlu0 %v231, 96
    %v251 = vpop.permute.xlu0 %250
    %252 = vrot.lane.b32.xlu0 %v234, 96
    %v253 = vpop.permute.xlu0 %252
    %254 = vrot.lane.b32.xlu0 %v237, 96
    %v255 = vpop.permute.xlu0 %254
    %256 = vrot.lane.b32.xlu0 %v240, 96
    %v257 = vpop.permute.xlu0 %256
    %vm258 = vcmask 64512
    %v260 = vsel %vm258, %v242, 0
    %v263 = vsel %vm258, %v243, 0
    %v266 = vsel %vm258, %v244, 0
    %v269 = vsel %vm258, %v245, 0
    %v271 = vsel %vm258, %v251, 0
    %v273 = vsel %vm258, %v253, 0
    %v275 = vsel %vm258, %v255, 0
    %v277 = vsel %vm258, %v257, 0
    %279 = vmatpush.xpose.msra.mxu0 0.0
    %280 = vmatpush.xpose.msra.mxu0 0.0
    %281 = vmatpush.xpose.msra.mxu0 0.0
    %282 = vmatpush.xpose.msra.mxu0 0.0
    %283 = vmatpush.xpose.msra.mxu0 0.0
    %284 = vmatpush.xpose.msra.mxu0 0.0
    %285 = vmatpush.xpose.msra.mxu0 0.0
    %286 = vmatpush.xpose.msra.mxu0 0.0
    %287 = vmatpush.xpose.msra.mxu0 0.0
    %288 = vmatpush.xpose.msra.mxu0 0.0
    %289 = vmatpush.xpose.msra.mxu0 0.0
    %290 = vmatpush.xpose.msra.mxu0 0.0
    %291 = vmatpush.xpose.msra.mxu0 %v277
    %292 = vmatpush.xpose.msra.mxu0 %v275
    %293 = vmatpush.xpose.msra.mxu0 %v273
    %294 = vmatpush.xpose.msra.mxu0 %v271
    %295 = vmatmul.f32.gmra.mxu0 %v260
    %v296 = vpop.f32.mrf.mxu0
    %v297 = vadd.f32 0.0, %v296
    %298 = vmatmul.f32.gmra.mxu0 %v263
    %v299 = vpop.f32.mrf.mxu0
    %v300 = vadd.f32 0.0, %v299
    %301 = vmatmul.f32.gmra.mxu0 %v266
    %v302 = vpop.f32.mrf.mxu0
    %v303 = vadd.f32 0.0, %v302
    %304 = vmatmul.f32.gmra.mxu0 %v269
    %v305 = vpop.f32.mrf.mxu0
    %v306 = vadd.f32 0.0, %v305
    %307 = vdwg.mxu0
    %308 = vrot.lane.b32.xlu0 %v242, 120
    %v309 = vpop.permute.xlu0 %308
    %310 = vrot.lane.b32.xlu0 %v243, 120
    %v311 = vpop.permute.xlu0 %310
    %312 = vrot.lane.b32.xlu0 %v244, 120
    %v313 = vpop.permute.xlu0 %312
    %314 = vrot.lane.b32.xlu0 %v245, 120
    %v315 = vpop.permute.xlu0 %314
    %316 = vrot.lane.b32.xlu0 %v231, 88
    %v317 = vpop.permute.xlu0 %316
    %318 = vrot.lane.b32.xlu0 %v234, 88
    %v319 = vpop.permute.xlu0 %318
    %320 = vrot.lane.b32.xlu0 %v237, 88
    %v321 = vpop.permute.xlu0 %320
    %322 = vrot.lane.b32.xlu0 %v240, 88
    %v323 = vpop.permute.xlu0 %322
    %v324 = vsel %vm258, %v309, 0
    %v326 = vsel %vm258, %v311, 0
    %v328 = vsel %vm258, %v313, 0
    %v330 = vsel %vm258, %v315, 0
    %v332 = vsel %vm258, %v317, 0
    %v334 = vsel %vm258, %v319, 0
    %v336 = vsel %vm258, %v321, 0
    %v338 = vsel %vm258, %v323, 0
    %340 = vmatpush.xpose.msra.mxu0 0.0
    %341 = vmatpush.xpose.msra.mxu0 0.0
    %342 = vmatpush.xpose.msra.mxu0 0.0
    %343 = vmatpush.xpose.msra.mxu0 0.0
    %344 = vmatpush.xpose.msra.mxu0 0.0
    %345 = vmatpush.xpose.msra.mxu0 0.0
    %346 = vmatpush.xpose.msra.mxu0 0.0
    %347 = vmatpush.xpose.msra.mxu0 0.0
    %348 = vmatpush.xpose.msra.mxu0 0.0
    %349 = vmatpush.xpose.msra.mxu0 0.0
    %350 = vmatpush.xpose.msra.mxu0 0.0
    %351 = vmatpush.xpose.msra.mxu0 0.0
    %352 = vmatpush.xpose.msra.mxu0 %v338
    %353 = vmatpush.xpose.msra.mxu0 %v336
    %354 = vmatpush.xpose.msra.mxu0 %v334
    %355 = vmatpush.xpose.msra.mxu0 %v332
    %356 = vmatmul.f32.gmra.mxu0 %v324
    %v357 = vpop.f32.mrf.mxu0
    %v358 = vadd.f32 0.0, %v357
    %359 = vmatmul.f32.gmra.mxu0 %v326
    %v360 = vpop.f32.mrf.mxu0
    %v361 = vadd.f32 0.0, %v360
    %362 = vmatmul.f32.gmra.mxu0 %v328
    %v363 = vpop.f32.mrf.mxu0
    %v364 = vadd.f32 0.0, %v363
    %365 = vmatmul.f32.gmra.mxu0 %v330
    %v366 = vpop.f32.mrf.mxu0
    %v367 = vadd.f32 0.0, %v366
    %368 = vdwg.mxu0
    %369 = vrot.lane.b32.xlu0 %v242, 112
    %v370 = vpop.permute.xlu0 %369
    %371 = vrot.lane.b32.xlu0 %v243, 112
    %v372 = vpop.permute.xlu0 %371
    %373 = vrot.lane.b32.xlu0 %v244, 112
    %v374 = vpop.permute.xlu0 %373
    %375 = vrot.lane.b32.xlu0 %v245, 112
    %v376 = vpop.permute.xlu0 %375
    %377 = vrot.lane.b32.xlu0 %v231, 80
    %v378 = vpop.permute.xlu0 %377
    %379 = vrot.lane.b32.xlu0 %v234, 80
    %v380 = vpop.permute.xlu0 %379
    %381 = vrot.lane.b32.xlu0 %v237, 80
    %v382 = vpop.permute.xlu0 %381
    %383 = vrot.lane.b32.xlu0 %v240, 80
    %v384 = vpop.permute.xlu0 %383
    %v385 = vsel %vm258, %v370, 0
    %v387 = vsel %vm258, %v372, 0
    %v389 = vsel %vm258, %v374, 0
    %v391 = vsel %vm258, %v376, 0
    %v393 = vsel %vm258, %v378, 0
    %v395 = vsel %vm258, %v380, 0
    %v397 = vsel %vm258, %v382, 0
    %v399 = vsel %vm258, %v384, 0
    %401 = vmatpush.xpose.msra.mxu0 0.0
    %402 = vmatpush.xpose.msra.mxu0 0.0
    %403 = vmatpush.xpose.msra.mxu0 0.0
    %404 = vmatpush.xpose.msra.mxu0 0.0
    %405 = vmatpush.xpose.msra.mxu0 0.0
    %406 = vmatpush.xpose.msra.mxu0 0.0
    %407 = vmatpush.xpose.msra.mxu0 0.0
    %408 = vmatpush.xpose.msra.mxu0 0.0
    %409 = vmatpush.xpose.msra.mxu0 0.0
    %410 = vmatpush.xpose.msra.mxu0 0.0
    %411 = vmatpush.xpose.msra.mxu0 0.0
    %412 = vmatpush.xpose.msra.mxu0 0.0
    %413 = vmatpush.xpose.msra.mxu0 %v399
    %414 = vmatpush.xpose.msra.mxu0 %v397
    %415 = vmatpush.xpose.msra.mxu0 %v395
    %416 = vmatpush.xpose.msra.mxu0 %v393
    %417 = vmatmul.f32.gmra.mxu0 %v385
    %v418 = vpop.f32.mrf.mxu0
    %v419 = vadd.f32 0.0, %v418
    %420 = vmatmul.f32.gmra.mxu0 %v387
    %v421 = vpop.f32.mrf.mxu0
    %v422 = vadd.f32 0.0, %v421
    %423 = vmatmul.f32.gmra.mxu0 %v389
    %v424 = vpop.f32.mrf.mxu0
    %v425 = vadd.f32 0.0, %v424
    %426 = vmatmul.f32.gmra.mxu0 %v391
    %v427 = vpop.f32.mrf.mxu0
    %v428 = vadd.f32 0.0, %v427
    %429 = vdwg.mxu0
    %430 = vrot.lane.b32.xlu0 %v242, 104
    %v431 = vpop.permute.xlu0 %430
    %432 = vrot.lane.b32.xlu0 %v243, 104
    %v433 = vpop.permute.xlu0 %432
    %434 = vrot.lane.b32.xlu0 %v244, 104
    %v435 = vpop.permute.xlu0 %434
    %436 = vrot.lane.b32.xlu0 %v245, 104
    %v437 = vpop.permute.xlu0 %436
    %438 = vrot.lane.b32.xlu0 %v231, 72
    %v439 = vpop.permute.xlu0 %438
    %440 = vrot.lane.b32.xlu0 %v234, 72
    %v441 = vpop.permute.xlu0 %440
    %442 = vrot.lane.b32.xlu0 %v237, 72
    %v443 = vpop.permute.xlu0 %442
    %444 = vrot.lane.b32.xlu0 %v240, 72
    %v445 = vpop.permute.xlu0 %444
    %v446 = vsel %vm258, %v431, 0
    %v448 = vsel %vm258, %v433, 0
    %v450 = vsel %vm258, %v435, 0
    %v452 = vsel %vm258, %v437, 0
    %v454 = vsel %vm258, %v439, 0
    %v456 = vsel %vm258, %v441, 0
    %v458 = vsel %vm258, %v443, 0
    %v460 = vsel %vm258, %v445, 0
    %462 = vmatpush.xpose.msra.mxu0 0.0
    %463 = vmatpush.xpose.msra.mxu0 0.0
    %464 = vmatpush.xpose.msra.mxu0 0.0
    %465 = vmatpush.xpose.msra.mxu0 0.0
    %466 = vmatpush.xpose.msra.mxu0 0.0
    %467 = vmatpush.xpose.msra.mxu0 0.0
    %468 = vmatpush.xpose.msra.mxu0 0.0
    %469 = vmatpush.xpose.msra.mxu0 0.0
    %470 = vmatpush.xpose.msra.mxu0 0.0
    %471 = vmatpush.xpose.msra.mxu0 0.0
    %472 = vmatpush.xpose.msra.mxu0 0.0
    %473 = vmatpush.xpose.msra.mxu0 0.0
    %474 = vmatpush.xpose.msra.mxu0 %v460
    %475 = vmatpush.xpose.msra.mxu0 %v458
    %476 = vmatpush.xpose.msra.mxu0 %v456
    %477 = vmatpush.xpose.msra.mxu0 %v454
    %478 = vmatmul.f32.gmra.mxu0 %v446
    %v479 = vpop.f32.mrf.mxu0
    %v480 = vadd.f32 0.0, %v479
    %481 = vmatmul.f32.gmra.mxu0 %v448
    %v482 = vpop.f32.mrf.mxu0
    %v483 = vadd.f32 0.0, %v482
    %484 = vmatmul.f32.gmra.mxu0 %v450
    %v485 = vpop.f32.mrf.mxu0
    %v486 = vadd.f32 0.0, %v485
    %487 = vmatmul.f32.gmra.mxu0 %v452
    %v488 = vpop.f32.mrf.mxu0
    %v489 = vadd.f32 0.0, %v488
    %490 = vdwg.mxu0
    %v491 = vsel %vm86, 1, 0
    %v492 = vsel %vm87, 1, 0
    %v493 = vsel %vm88, 1, 0
    %v494 = vsel %vm89, 1, 0
    %vm495 = vcmp.eq.s32.totalorder %v491, 1
    %vm496 = vcmp.eq.s32.totalorder %v492, 1
    %vm497 = vcmp.eq.s32.totalorder %v493, 1
    %vm498 = vcmp.eq.s32.totalorder %v494, 1
    %v499 = vsel %vm495, %v297, -1e+30
    %v500 = vsel %vm496, %v300, -1e+30
    %v501 = vsel %vm497, %v303, -1e+30
    %v502 = vsel %vm498, %v306, -1e+30
    %v503 = vsel %vm495, %v358, -1e+30
    %v504 = vsel %vm496, %v361, -1e+30
    %v505 = vsel %vm497, %v364, -1e+30
    %v506 = vsel %vm498, %v367, -1e+30
    %v507 = vsel %vm495, %v419, -1e+30
    %v508 = vsel %vm496, %v422, -1e+30
    %v509 = vsel %vm497, %v425, -1e+30
    %v510 = vsel %vm498, %v428, -1e+30
    %v511 = vsel %vm495, %v480, -1e+30
    %v512 = vsel %vm496, %v483, -1e+30
    %v513 = vsel %vm497, %v486, -1e+30
    %v514 = vsel %vm498, %v489, -1e+30
    %v515 = vsel %vm95, %v499, -inf
    %516 = vmax.xlane.f32.xlu0 %v515
    %v517 = vpop.xlane.xlu0 %516
    %v518 = vsel %vm95, %v500, -inf
    %519 = vmax.xlane.f32.xlu0 %v518
    %v520 = vpop.xlane.xlu0 %519
    %v521 = vsel %vm95, %v501, -inf
    %522 = vmax.xlane.f32.xlu0 %v521
    %v523 = vpop.xlane.xlu0 %522
    %v524 = vsel %vm95, %v502, -inf
    %525 = vmax.xlane.f32.xlu0 %v524
    %v526 = vpop.xlane.xlu0 %525
    %v527 = vsel %vm95, %v503, -inf
    %528 = vmax.xlane.f32.xlu0 %v527
    %v529 = vpop.xlane.xlu0 %528
    %v530 = vsel %vm95, %v504, -inf
    %531 = vmax.xlane.f32.xlu0 %v530
    %v532 = vpop.xlane.xlu0 %531
    %v533 = vsel %vm95, %v505, -inf
    %534 = vmax.xlane.f32.xlu0 %v533
    %v535 = vpop.xlane.xlu0 %534
    %v536 = vsel %vm95, %v506, -inf
    %537 = vmax.xlane.f32.xlu0 %v536
    %v538 = vpop.xlane.xlu0 %537
    %v539 = vsel %vm95, %v507, -inf
    %540 = vmax.xlane.f32.xlu0 %v539
    %v541 = vpop.xlane.xlu0 %540
    %v542 = vsel %vm95, %v508, -inf
    %543 = vmax.xlane.f32.xlu0 %v542
    %v544 = vpop.xlane.xlu0 %543
    %v545 = vsel %vm95, %v509, -inf
    %546 = vmax.xlane.f32.xlu0 %v545
    %v547 = vpop.xlane.xlu0 %546
    %v548 = vsel %vm95, %v510, -inf
    %549 = vmax.xlane.f32.xlu0 %v548
    %v550 = vpop.xlane.xlu0 %549
    %v551 = vsel %vm95, %v511, -inf
    %552 = vmax.xlane.f32.xlu0 %v551
    %v553 = vpop.xlane.xlu0 %552
    %v554 = vsel %vm95, %v512, -inf
    %555 = vmax.xlane.f32.xlu0 %v554
    %v556 = vpop.xlane.xlu0 %555
    %v557 = vsel %vm95, %v513, -inf
    %558 = vmax.xlane.f32.xlu0 %v557
    %v559 = vpop.xlane.xlu0 %558
    %v560 = vsel %vm95, %v514, -inf
    %561 = vmax.xlane.f32.xlu0 %v560
    %v562 = vpop.xlane.xlu0 %561
    %v563 = vsub.f32 %v499, %v517
    %v564 = vsub.f32 %v500, %v520
    %v565 = vsub.f32 %v501, %v523
    %v566 = vsub.f32 %v502, %v526
    %v567 = vsub.f32 %v503, %v529
    %v568 = vsub.f32 %v504, %v532
    %v569 = vsub.f32 %v505, %v535
    %v570 = vsub.f32 %v506, %v538
    %v571 = vsub.f32 %v507, %v541
    %v572 = vsub.f32 %v508, %v544
    %v573 = vsub.f32 %v509, %v547
    %v574 = vsub.f32 %v510, %v550
    %v575 = vsub.f32 %v511, %v553
    %v576 = vsub.f32 %v512, %v556
    %v577 = vsub.f32 %v513, %v559
    %v578 = vsub.f32 %v514, %v562
    %v579 = vmul.f32 %v563, 1.442695
    %v580 = vpow.pop %v579
    %v581 = vmul.f32 %v564, 1.442695
    %v582 = vpow.pop %v581
    %v583 = vmul.f32 %v565, 1.442695
    %v584 = vpow.pop %v583
    %v585 = vmul.f32 %v566, 1.442695
    %v586 = vpow.pop %v585
    %v587 = vmul.f32 %v567, 1.442695
    %v588 = vpow.pop %v587
    %v589 = vmul.f32 %v568, 1.442695
    %v590 = vpow.pop %v589
    %v591 = vmul.f32 %v569, 1.442695
    %v592 = vpow.pop %v591
    %v593 = vmul.f32 %v570, 1.442695
    %v594 = vpow.pop %v593
    %v595 = vmul.f32 %v571, 1.442695
    %v596 = vpow.pop %v595
    %v597 = vmul.f32 %v572, 1.442695
    %v598 = vpow.pop %v597
    %v599 = vmul.f32 %v573, 1.442695
    %v600 = vpow.pop %v599
    %v601 = vmul.f32 %v574, 1.442695
    %v602 = vpow.pop %v601
    %v603 = vmul.f32 %v575, 1.442695
    %v604 = vpow.pop %v603
    %v605 = vmul.f32 %v576, 1.442695
    %v606 = vpow.pop %v605
    %v607 = vmul.f32 %v577, 1.442695
    %v608 = vpow.pop %v607
    %v609 = vmul.f32 %v578, 1.442695
    %v610 = vpow.pop %v609
    %v611 = vsel %vm95, %v580, 0.0
    %612 = vadd.xlane.f32.xlu0 %v611
    %v613 = vpop.xlane.xlu0 %612
    %v614 = vsel %vm95, %v582, 0.0
    %615 = vadd.xlane.f32.xlu0 %v614
    %v616 = vpop.xlane.xlu0 %615
    %v617 = vsel %vm95, %v584, 0.0
    %618 = vadd.xlane.f32.xlu0 %v617
    %v619 = vpop.xlane.xlu0 %618
    %v620 = vsel %vm95, %v586, 0.0
    %621 = vadd.xlane.f32.xlu0 %v620
    %v622 = vpop.xlane.xlu0 %621
    %v623 = vsel %vm95, %v588, 0.0
    %624 = vadd.xlane.f32.xlu0 %v623
    %v625 = vpop.xlane.xlu0 %624
    %v626 = vsel %vm95, %v590, 0.0
    %627 = vadd.xlane.f32.xlu0 %v626
    %v628 = vpop.xlane.xlu0 %627
    %v629 = vsel %vm95, %v592, 0.0
    %630 = vadd.xlane.f32.xlu0 %v629
    %v631 = vpop.xlane.xlu0 %630
    %v632 = vsel %vm95, %v594, 0.0
    %633 = vadd.xlane.f32.xlu0 %v632
    %v634 = vpop.xlane.xlu0 %633
    %v635 = vsel %vm95, %v596, 0.0
    %636 = vadd.xlane.f32.xlu0 %v635
    %v637 = vpop.xlane.xlu0 %636
    %v638 = vsel %vm95, %v598, 0.0
    %639 = vadd.xlane.f32.xlu0 %v638
    %v640 = vpop.xlane.xlu0 %639
    %v641 = vsel %vm95, %v600, 0.0
    %642 = vadd.xlane.f32.xlu0 %v641
    %v643 = vpop.xlane.xlu0 %642
    %v644 = vsel %vm95, %v602, 0.0
    %645 = vadd.xlane.f32.xlu0 %v644
    %v646 = vpop.xlane.xlu0 %645
    %v647 = vsel %vm95, %v604, 0.0
    %648 = vadd.xlane.f32.xlu0 %v647
    %v649 = vpop.xlane.xlu0 %648
    %v650 = vsel %vm95, %v606, 0.0
    %651 = vadd.xlane.f32.xlu0 %v650
    %v652 = vpop.xlane.xlu0 %651
    %v653 = vsel %vm95, %v608, 0.0
    %654 = vadd.xlane.f32.xlu0 %v653
    %v655 = vpop.xlane.xlu0 %654
    %v656 = vsel %vm95, %v610, 0.0
    %657 = vadd.xlane.f32.xlu0 %v656
    %v658 = vpop.xlane.xlu0 %657
    %v659 = vrcp.pop %v613
    %v660 = vrcp.pop %v616
    %v661 = vrcp.pop %v619
    %v662 = vrcp.pop %v622
    %v663 = vrcp.pop %v625
    %v664 = vrcp.pop %v628
    %v665 = vrcp.pop %v631
    %v666 = vrcp.pop %v634
    %v667 = vrcp.pop %v637
    %v668 = vrcp.pop %v640
    %v669 = vrcp.pop %v643
    %v670 = vrcp.pop %v646
    %v671 = vrcp.pop %v649
    %v672 = vrcp.pop %v652
    %v673 = vrcp.pop %v655
    %v674 = vrcp.pop %v658
    %v675 = vmul.f32 %v580, %v659
    %v676 = vmul.f32 %v582, %v660
    %v677 = vmul.f32 %v584, %v661
    %v678 = vmul.f32 %v586, %v662
    %v679 = vmul.f32 %v588, %v663
    %v680 = vmul.f32 %v590, %v664
    %v681 = vmul.f32 %v592, %v665
    %v682 = vmul.f32 %v594, %v666
    %v683 = vmul.f32 %v596, %v667
    %v684 = vmul.f32 %v598, %v668
    %v685 = vmul.f32 %v600, %v669
    %v686 = vmul.f32 %v602, %v670
    %v687 = vmul.f32 %v604, %v671
    %v688 = vmul.f32 %v606, %v672
    %v689 = vmul.f32 %v608, %v673
    %v690 = vmul.f32 %v610, %v674
    %691 = vrot.lane.b32.xlu0 %v231, 64
    %v692 = vpop.permute.xlu0 %691
    %693 = vrot.lane.b32.xlu0 %v234, 64
    %v694 = vpop.permute.xlu0 %693
    %695 = vrot.lane.b32.xlu0 %v237, 64
    %v696 = vpop.permute.xlu0 %695
    %697 = vrot.lane.b32.xlu0 %v240, 64
    %v698 = vpop.permute.xlu0 %697
    %v704 = vsel %vm95, %v675, 0
    %v707 = vsel %vm95, %v676, 0
    %v710 = vsel %vm95, %v677, 0
    %v713 = vsel %vm95, %v678, 0
    %715 = vmatpush.msra.mxu0 0.0
    %716 = vmatpush.msra.mxu0 0.0
    %717 = vmatpush.msra.mxu0 0.0
    %718 = vmatpush.msra.mxu0 0.0
    %719 = vmatpush.msra.mxu0 0.0
    %720 = vmatpush.msra.mxu0 0.0
    %721 = vmatpush.msra.mxu0 0.0
    %722 = vmatpush.msra.mxu0 0.0
    %723 = vmatpush.msra.mxu0 0.0
    %724 = vmatpush.msra.mxu0 0.0
    %725 = vmatpush.msra.mxu0 0.0
    %726 = vmatpush.msra.mxu0 0.0
    %727 = vmatpush.msra.mxu0 %v698
    %728 = vmatpush.msra.mxu0 %v696
    %729 = vmatpush.msra.mxu0 %v694
    %730 = vmatpush.msra.mxu0 %v692
    %731 = vmatmul.f32.gmra.mxu0 %v704
    %v732 = vpop.f32.mrf.mxu0
    %v733 = vadd.f32 0.0, %v732
    %734 = vmatmul.f32.gmra.mxu0 %v707
    %v735 = vpop.f32.mrf.mxu0
    %v736 = vadd.f32 0.0, %v735
    %737 = vmatmul.f32.gmra.mxu0 %v710
    %v738 = vpop.f32.mrf.mxu0
    %v739 = vadd.f32 0.0, %v738
    %740 = vmatmul.f32.gmra.mxu0 %v713
    %v741 = vpop.f32.mrf.mxu0
    %v742 = vadd.f32 0.0, %v741
    %743 = vdwg.mxu0
    %744 = vrot.lane.b32.xlu0 %v231, 56
    %v745 = vpop.permute.xlu0 %744
    %746 = vrot.lane.b32.xlu0 %v234, 56
    %v747 = vpop.permute.xlu0 %746
    %748 = vrot.lane.b32.xlu0 %v237, 56
    %v749 = vpop.permute.xlu0 %748
    %750 = vrot.lane.b32.xlu0 %v240, 56
    %v751 = vpop.permute.xlu0 %750
    %v757 = vsel %vm95, %v679, 0
    %v760 = vsel %vm95, %v680, 0
    %v763 = vsel %vm95, %v681, 0
    %v766 = vsel %vm95, %v682, 0
    %768 = vmatpush.msra.mxu0 0.0
    %769 = vmatpush.msra.mxu0 0.0
    %770 = vmatpush.msra.mxu0 0.0
    %771 = vmatpush.msra.mxu0 0.0
    %772 = vmatpush.msra.mxu0 0.0
    %773 = vmatpush.msra.mxu0 0.0
    %774 = vmatpush.msra.mxu0 0.0
    %775 = vmatpush.msra.mxu0 0.0
    %776 = vmatpush.msra.mxu0 0.0
    %777 = vmatpush.msra.mxu0 0.0
    %778 = vmatpush.msra.mxu0 0.0
    %779 = vmatpush.msra.mxu0 0.0
    %780 = vmatpush.msra.mxu0 %v751
    %781 = vmatpush.msra.mxu0 %v749
    %782 = vmatpush.msra.mxu0 %v747
    %783 = vmatpush.msra.mxu0 %v745
    %784 = vmatmul.f32.gmra.mxu0 %v757
    %v785 = vpop.f32.mrf.mxu0
    %v786 = vadd.f32 0.0, %v785
    %787 = vmatmul.f32.gmra.mxu0 %v760
    %v788 = vpop.f32.mrf.mxu0
    %v789 = vadd.f32 0.0, %v788
    %790 = vmatmul.f32.gmra.mxu0 %v763
    %v791 = vpop.f32.mrf.mxu0
    %v792 = vadd.f32 0.0, %v791
    %793 = vmatmul.f32.gmra.mxu0 %v766
    %v794 = vpop.f32.mrf.mxu0
    %v795 = vadd.f32 0.0, %v794
    %796 = vdwg.mxu0
    %797 = vrot.lane.b32.xlu0 %v231, 48
    %v798 = vpop.permute.xlu0 %797
    %799 = vrot.lane.b32.xlu0 %v234, 48
    %v800 = vpop.permute.xlu0 %799
    %801 = vrot.lane.b32.xlu0 %v237, 48
    %v802 = vpop.permute.xlu0 %801
    %803 = vrot.lane.b32.xlu0 %v240, 48
    %v804 = vpop.permute.xlu0 %803
    %v810 = vsel %vm95, %v683, 0
    %v813 = vsel %vm95, %v684, 0
    %v816 = vsel %vm95, %v685, 0
    %v819 = vsel %vm95, %v686, 0
    %821 = vmatpush.msra.mxu0 0.0
    %822 = vmatpush.msra.mxu0 0.0
    %823 = vmatpush.msra.mxu0 0.0
    %824 = vmatpush.msra.mxu0 0.0
    %825 = vmatpush.msra.mxu0 0.0
    %826 = vmatpush.msra.mxu0 0.0
    %827 = vmatpush.msra.mxu0 0.0
    %828 = vmatpush.msra.mxu0 0.0
    %829 = vmatpush.msra.mxu0 0.0
    %830 = vmatpush.msra.mxu0 0.0
    %831 = vmatpush.msra.mxu0 0.0
    %832 = vmatpush.msra.mxu0 0.0
    %833 = vmatpush.msra.mxu0 %v804
    %834 = vmatpush.msra.mxu0 %v802
    %835 = vmatpush.msra.mxu0 %v800
    %836 = vmatpush.msra.mxu0 %v798
    %837 = vmatmul.f32.gmra.mxu0 %v810
    %v838 = vpop.f32.mrf.mxu0
    %v839 = vadd.f32 0.0, %v838
    %840 = vmatmul.f32.gmra.mxu0 %v813
    %v841 = vpop.f32.mrf.mxu0
    %v842 = vadd.f32 0.0, %v841
    %843 = vmatmul.f32.gmra.mxu0 %v816
    %v844 = vpop.f32.mrf.mxu0
    %v845 = vadd.f32 0.0, %v844
    %846 = vmatmul.f32.gmra.mxu0 %v819
    %v847 = vpop.f32.mrf.mxu0
    %v848 = vadd.f32 0.0, %v847
    %849 = vdwg.mxu0
    %850 = vrot.lane.b32.xlu0 %v231, 40
    %v851 = vpop.permute.xlu0 %850
    %852 = vrot.lane.b32.xlu0 %v234, 40
    %v853 = vpop.permute.xlu0 %852
    %854 = vrot.lane.b32.xlu0 %v237, 40
    %v855 = vpop.permute.xlu0 %854
    %856 = vrot.lane.b32.xlu0 %v240, 40
    %v857 = vpop.permute.xlu0 %856
    %v863 = vsel %vm95, %v687, 0
    %v866 = vsel %vm95, %v688, 0
    %v869 = vsel %vm95, %v689, 0
    %v872 = vsel %vm95, %v690, 0
    %874 = vmatpush.msra.mxu0 0.0
    %875 = vmatpush.msra.mxu0 0.0
    %876 = vmatpush.msra.mxu0 0.0
    %877 = vmatpush.msra.mxu0 0.0
    %878 = vmatpush.msra.mxu0 0.0
    %879 = vmatpush.msra.mxu0 0.0
    %880 = vmatpush.msra.mxu0 0.0
    %881 = vmatpush.msra.mxu0 0.0
    %882 = vmatpush.msra.mxu0 0.0
    %883 = vmatpush.msra.mxu0 0.0
    %884 = vmatpush.msra.mxu0 0.0
    %885 = vmatpush.msra.mxu0 0.0
    %886 = vmatpush.msra.mxu0 %v857
    %887 = vmatpush.msra.mxu0 %v855
    %888 = vmatpush.msra.mxu0 %v853
    %889 = vmatpush.msra.mxu0 %v851
    %890 = vmatmul.f32.gmra.mxu0 %v863
    %v891 = vpop.f32.mrf.mxu0
    %v892 = vadd.f32 0.0, %v891
    %893 = vmatmul.f32.gmra.mxu0 %v866
    %v894 = vpop.f32.mrf.mxu0
    %v895 = vadd.f32 0.0, %v894
    %896 = vmatmul.f32.gmra.mxu0 %v869
    %v897 = vpop.f32.mrf.mxu0
    %v898 = vadd.f32 0.0, %v897
    %899 = vmatmul.f32.gmra.mxu0 %v872
    %v900 = vpop.f32.mrf.mxu0
    %v901 = vadd.f32 0.0, %v900
    %902 = vdwg.mxu0
    %907 = vrot.lane.b32.xlu0 %v786, 8
    %v908 = vpop.permute.xlu0 %907
    %909 = vrot.lane.b32.xlu0 %v789, 8
    %v910 = vpop.permute.xlu0 %909
    %911 = vrot.lane.b32.xlu0 %v792, 8
    %v912 = vpop.permute.xlu0 %911
    %913 = vrot.lane.b32.xlu0 %v795, 8
    %v914 = vpop.permute.xlu0 %913
    %923 = vrot.lane.b32.xlu0 %v839, 16
    %v924 = vpop.permute.xlu0 %923
    %925 = vrot.lane.b32.xlu0 %v842, 16
    %v926 = vpop.permute.xlu0 %925
    %927 = vrot.lane.b32.xlu0 %v845, 16
    %v928 = vpop.permute.xlu0 %927
    %929 = vrot.lane.b32.xlu0 %v848, 16
    %v930 = vpop.permute.xlu0 %929
    %939 = vrot.lane.b32.xlu0 %v892, 24
    %v940 = vpop.permute.xlu0 %939
    %941 = vrot.lane.b32.xlu0 %v895, 24
    %v942 = vpop.permute.xlu0 %941
    %943 = vrot.lane.b32.xlu0 %v898, 24
    %v944 = vpop.permute.xlu0 %943
    %945 = vrot.lane.b32.xlu0 %v901, 24
    %v946 = vpop.permute.xlu0 %945
    %v951 = vsel %vm258, %v733, %v908
    %v952 = vsel %vm258, %v736, %v910
    %v953 = vsel %vm258, %v739, %v912
    %v954 = vsel %vm258, %v742, %v914
    %vm955 = vcmask 130048
    %v956 = vsel %vm955, %v951, %v924
    %v957 = vsel %vm955, %v952, %v926
    %v958 = vsel %vm955, %v953, %v928
    %v959 = vsel %vm955, %v954, %v930
    %vm960 = vcmask 195584
    %v961 = vsel %vm960, %v956, %v940
    %v962 = vsel %vm960, %v957, %v942
    %v963 = vsel %vm960, %v958, %v944
    %v964 = vsel %vm960, %v959, %v946
    %v965 = vperm.slane %v65, 0
    %v967 = vsel %vm95, %v961, 0
    %v970 = vsel %vm95, %v962, 0
    %v973 = vsel %vm95, %v963, 0
    %v976 = vsel %vm95, %v964, 0
    %978 = vmatpush.msra.mxu0 0.0
    %979 = vmatpush.msra.mxu0 0.0
    %980 = vmatpush.msra.mxu0 0.0
    %981 = vmatpush.msra.mxu0 0.0
    %982 = vmatpush.msra.mxu0 0.0
    %983 = vmatpush.msra.mxu0 0.0
    %984 = vmatpush.msra.mxu0 0.0
    %985 = vmatpush.msra.mxu0 0.0
    %986 = vmatpush.msra.mxu0 0.0
    %987 = vmatpush.msra.mxu0 0.0
    %988 = vmatpush.msra.mxu0 0.0
    %989 = vmatpush.msra.mxu0 0.0
    %990 = vmatpush.msra.mxu0 %v28
    %991 = vmatpush.msra.mxu0 %v27
    %992 = vmatpush.msra.mxu0 %v26
    %993 = vmatpush.msra.mxu0 %v25
    %994 = vmatmul.f32.gmra.mxu0 %v967
    %v995 = vpop.f32.mrf.mxu0
    %v996 = vadd.f32 %v965, %v995
    %997 = vmatmul.f32.gmra.mxu0 %v970
    %v998 = vpop.f32.mrf.mxu0
    %v999 = vadd.f32 %v965, %v998
    %1000 = vmatmul.f32.gmra.mxu0 %v973
    %v1001 = vpop.f32.mrf.mxu0
    %v1002 = vadd.f32 %v965, %v1001
    %1003 = vmatmul.f32.gmra.mxu0 %v976
    %v1004 = vpop.f32.mrf.mxu0
    %v1005 = vadd.f32 %v965, %v1004
    %1006 = vdwg.mxu0
    %v1007 = vadd.f32 %v15, %v996
    %v1008 = vadd.f32 %v16, %v999
    %v1009 = vadd.f32 %v17, %v1002
    %v1010 = vadd.f32 %v18, %v1005
    %v1011 = vsel %vm95, %v1007, 0.0
    %1012 = vadd.xlane.f32.xlu0 %v1011
    %v1013 = vpop.xlane.xlu0 %1012
    %v1014 = vsel %vm95, %v1008, 0.0
    %1015 = vadd.xlane.f32.xlu0 %v1014
    %v1016 = vpop.xlane.xlu0 %1015
    %v1017 = vsel %vm95, %v1009, 0.0
    %1018 = vadd.xlane.f32.xlu0 %v1017
    %v1019 = vpop.xlane.xlu0 %1018
    %v1020 = vsel %vm95, %v1010, 0.0
    %1021 = vadd.xlane.f32.xlu0 %v1020
    %v1022 = vpop.xlane.xlu0 %1021
    %v1023 = vmul.f32 %v1013, %v114
    %v1024 = vmul.f32 %v1016, %v114
    %v1025 = vmul.f32 %v1019, %v114
    %v1026 = vmul.f32 %v1022, %v114
    %v1027 = vsub.f32 %v1007, %v1023
    %v1028 = vsub.f32 %v1008, %v1024
    %v1029 = vsub.f32 %v1009, %v1025
    %v1030 = vsub.f32 %v1010, %v1026
    %v1031 = vmul.f32 %v1027, %v1027
    %v1032 = vmul.f32 %v1028, %v1028
    %v1033 = vmul.f32 %v1029, %v1029
    %v1034 = vmul.f32 %v1030, %v1030
    %v1035 = vsel %vm95, %v1031, 0.0
    %1036 = vadd.xlane.f32.xlu0 %v1035
    %v1037 = vpop.xlane.xlu0 %1036
    %v1038 = vsel %vm95, %v1032, 0.0
    %1039 = vadd.xlane.f32.xlu0 %v1038
    %v1040 = vpop.xlane.xlu0 %1039
    %v1041 = vsel %vm95, %v1033, 0.0
    %1042 = vadd.xlane.f32.xlu0 %v1041
    %v1043 = vpop.xlane.xlu0 %1042
    %v1044 = vsel %vm95, %v1034, 0.0
    %1045 = vadd.xlane.f32.xlu0 %v1044
    %v1046 = vpop.xlane.xlu0 %1045
    %v1047 = vmul.f32 %v1037, %v114
    %v1048 = vmul.f32 %v1040, %v114
    %v1049 = vmul.f32 %v1043, %v114
    %v1050 = vmul.f32 %v1046, %v114
    %v1051 = vadd.f32 %v1047, 1e-05
    %v1052 = vadd.f32 %v1048, 1e-05
    %v1053 = vadd.f32 %v1049, 1e-05
    %v1054 = vadd.f32 %v1050, 1e-05
    %v1055 = vrsqrt.pop %v1051
    %v1056 = vmul.f32 %v1055, %v1051
    %v1057 = vmul.f32 %v1056, %v1055
    %v1058 = vmul.f32 0.5, %v1057
    %v1059 = vsub.f32 1.5, %v1058
    %v1060 = vmul.f32 %v1055, %v1059
    %vm1061 = vweird.f32 %v1051
    %vm1062 = vweird.f32 %v1055
    %vm1063 = vmor %vm1061, %vm1062
    %v1064 = vsel %vm1063, %v1055, %v1060
    %v1065 = vrsqrt.pop %v1052
    %v1066 = vmul.f32 %v1065, %v1052
    %v1067 = vmul.f32 %v1066, %v1065
    %v1068 = vmul.f32 0.5, %v1067
    %v1069 = vsub.f32 1.5, %v1068
    %v1070 = vmul.f32 %v1065, %v1069
    %vm1071 = vweird.f32 %v1052
    %vm1072 = vweird.f32 %v1065
    %vm1073 = vmor %vm1071, %vm1072
    %v1074 = vsel %vm1073, %v1065, %v1070
    %v1075 = vrsqrt.pop %v1053
    %v1076 = vmul.f32 %v1075, %v1053
    %v1077 = vmul.f32 %v1076, %v1075
    %v1078 = vmul.f32 0.5, %v1077
    %v1079 = vsub.f32 1.5, %v1078
    %v1080 = vmul.f32 %v1075, %v1079
    %vm1081 = vweird.f32 %v1053
    %vm1082 = vweird.f32 %v1075
    %vm1083 = vmor %vm1081, %vm1082
    %v1084 = vsel %vm1083, %v1075, %v1080
    %v1085 = vrsqrt.pop %v1054
    %v1086 = vmul.f32 %v1085, %v1054
    %v1087 = vmul.f32 %v1086, %v1085
    %v1088 = vmul.f32 0.5, %v1087
    %v1089 = vsub.f32 1.5, %v1088
    %v1090 = vmul.f32 %v1085, %v1089
    %vm1091 = vweird.f32 %v1054
    %vm1092 = vweird.f32 %v1085
    %vm1093 = vmor %vm1091, %vm1092
    %v1094 = vsel %vm1093, %v1085, %v1090
    %v1095 = vmul.f32 %v1027, %v1064
    %v1096 = vmul.f32 %v1028, %v1074
    %v1097 = vmul.f32 %v1029, %v1084
    %v1098 = vmul.f32 %v1030, %v1094
    %v1099 = vperm.slane %v66, 0
    %v1100 = vmul.f32 %v1095, %v1099
    %v1101 = vmul.f32 %v1096, %v1099
    %v1102 = vmul.f32 %v1097, %v1099
    %v1103 = vmul.f32 %v1098, %v1099
    %v1104 = vperm.slane %v67, 0
    %v1105 = vadd.f32 %v1100, %v1104
    %v1106 = vadd.f32 %v1101, %v1104
    %v1107 = vadd.f32 %v1102, %v1104
    %v1108 = vadd.f32 %v1103, %v1104
    %v1110 = vsel %vm95, %v1105, 0
    %v1113 = vsel %vm95, %v1106, 0
    %v1116 = vsel %vm95, %v1107, 0
    %v1119 = vsel %vm95, %v1108, 0
    %1121 = vmatpush.msra.mxu0 0.0
    %1122 = vmatpush.msra.mxu0 0.0
    %1123 = vmatpush.msra.mxu0 0.0
    %1124 = vmatpush.msra.mxu0 0.0
    %1125 = vmatpush.msra.mxu0 0.0
    %1126 = vmatpush.msra.mxu0 0.0
    %1127 = vmatpush.msra.mxu0 0.0
    %1128 = vmatpush.msra.mxu0 0.0
    %1129 = vmatpush.msra.mxu0 0.0
    %1130 = vmatpush.msra.mxu0 0.0
    %1131 = vmatpush.msra.mxu0 0.0
    %1132 = vmatpush.msra.mxu0 0.0
    %1133 = vmatpush.msra.mxu0 %v32
    %1134 = vmatpush.msra.mxu0 %v31
    %1135 = vmatpush.msra.mxu0 %v30
    %1136 = vmatpush.msra.mxu0 %v29
    %1137 = vmatmul.f32.gmra.mxu0 %v1110
    %v1138 = vpop.f32.mrf.mxu0
    %v1139 = vadd.f32 0.0, %v1138
    %1140 = vmatmul.f32.gmra.mxu0 %v1113
    %v1141 = vpop.f32.mrf.mxu0
    %v1142 = vadd.f32 0.0, %v1141
    %1143 = vmatmul.f32.gmra.mxu0 %v1116
    %v1144 = vpop.f32.mrf.mxu0
    %v1145 = vadd.f32 0.0, %v1144
    %1146 = vmatmul.f32.gmra.mxu0 %v1119
    %v1147 = vpop.f32.mrf.mxu0
    %v1148 = vadd.f32 0.0, %v1147
    %1149 = vdwg.mxu0
    %v1150 = vmul.f32 %v1139, 0.35355338
    %v1151 = vmul.f32 %v1142, 0.35355338
    %v1152 = vmul.f32 %v1145, 0.35355338
    %v1153 = vmul.f32 %v1148, 0.35355338
    %v1155 = vsel %vm955, %v19, 0
    %v1158 = vsel %vm955, %v20, 0
    %1160 = vmatpush.msra.mxu0 0.0
    %1161 = vmatpush.msra.mxu0 0.0
    %1162 = vmatpush.msra.mxu0 0.0
    %1163 = vmatpush.msra.mxu0 0.0
    %1164 = vmatpush.msra.mxu0 0.0
    %1165 = vmatpush.msra.mxu0 0.0
    %1166 = vmatpush.msra.mxu0 0.0
    %1167 = vmatpush.msra.mxu0 0.0
    %1168 = vmatpush.msra.mxu0 0.0
    %1169 = vmatpush.msra.mxu0 0.0
    %1170 = vmatpush.msra.mxu0 0.0
    %1171 = vmatpush.msra.mxu0 0.0
    %1172 = vmatpush.msra.mxu0 0.0
    %1173 = vmatpush.msra.mxu0 0.0
    %1174 = vmatpush.msra.mxu0 %v34
    %1175 = vmatpush.msra.mxu0 %v33
    %1176 = vmatmul.f32.gmra.mxu0 %v1155
    %v1177 = vpop.f32.mrf.mxu0
    %v1178 = vadd.f32 0.0, %v1177
    %1179 = vmatmul.f32.gmra.mxu0 %v1158
    %v1180 = vpop.f32.mrf.mxu0
    %v1181 = vadd.f32 0.0, %v1180
    %1182 = vdwg.mxu0
    %v1184 = vsel %vm258, %v1150, 0
    %v1187 = vsel %vm258, %v1151, 0
    %v1190 = vsel %vm258, %v1152, 0
    %v1193 = vsel %vm258, %v1153, 0
    %v1196 = vsel %vm258, %v1178, 0
    %v1199 = vsel %vm258, %v1181, 0
    %1201 = vmatpush.xpose.msra.mxu0 0.0
    %1202 = vmatpush.xpose.msra.mxu0 0.0
    %1203 = vmatpush.xpose.msra.mxu0 0.0
    %1204 = vmatpush.xpose.msra.mxu0 0.0
    %1205 = vmatpush.xpose.msra.mxu0 0.0
    %1206 = vmatpush.xpose.msra.mxu0 0.0
    %1207 = vmatpush.xpose.msra.mxu0 0.0
    %1208 = vmatpush.xpose.msra.mxu0 0.0
    %1209 = vmatpush.xpose.msra.mxu0 0.0
    %1210 = vmatpush.xpose.msra.mxu0 0.0
    %1211 = vmatpush.xpose.msra.mxu0 0.0
    %1212 = vmatpush.xpose.msra.mxu0 0.0
    %1213 = vmatpush.xpose.msra.mxu0 0.0
    %1214 = vmatpush.xpose.msra.mxu0 0.0
    %1215 = vmatpush.xpose.msra.mxu0 %v1199
    %1216 = vmatpush.xpose.msra.mxu0 %v1196
    %1217 = vmatmul.f32.gmra.mxu0 %v1184
    %v1218 = vpop.f32.mrf.mxu0
    %v1219 = vadd.f32 0.0, %v1218
    %1220 = vmatmul.f32.gmra.mxu0 %v1187
    %v1221 = vpop.f32.mrf.mxu0
    %v1222 = vadd.f32 0.0, %v1221
    %1223 = vmatmul.f32.gmra.mxu0 %v1190
    %v1224 = vpop.f32.mrf.mxu0
    %v1225 = vadd.f32 0.0, %v1224
    %1226 = vmatmul.f32.gmra.mxu0 %v1193
    %v1227 = vpop.f32.mrf.mxu0
    %v1228 = vadd.f32 0.0, %v1227
    %1229 = vdwg.mxu0
    %1230 = vrot.lane.b32.xlu0 %v1150, 120
    %v1231 = vpop.permute.xlu0 %1230
    %1232 = vrot.lane.b32.xlu0 %v1151, 120
    %v1233 = vpop.permute.xlu0 %1232
    %1234 = vrot.lane.b32.xlu0 %v1152, 120
    %v1235 = vpop.permute.xlu0 %1234
    %1236 = vrot.lane.b32.xlu0 %v1153, 120
    %v1237 = vpop.permute.xlu0 %1236
    %1238 = vrot.lane.b32.xlu0 %v1178, 120
    %v1239 = vpop.permute.xlu0 %1238
    %1240 = vrot.lane.b32.xlu0 %v1181, 120
    %v1241 = vpop.permute.xlu0 %1240
    %v1242 = vsel %vm258, %v1231, 0
    %v1244 = vsel %vm258, %v1233, 0
    %v1246 = vsel %vm258, %v1235, 0
    %v1248 = vsel %vm258, %v1237, 0
    %v1250 = vsel %vm258, %v1239, 0
    %v1252 = vsel %vm258, %v1241, 0
    %1254 = vmatpush.xpose.msra.mxu0 0.0
    %1255 = vmatpush.xpose.msra.mxu0 0.0
    %1256 = vmatpush.xpose.msra.mxu0 0.0
    %1257 = vmatpush.xpose.msra.mxu0 0.0
    %1258 = vmatpush.xpose.msra.mxu0 0.0
    %1259 = vmatpush.xpose.msra.mxu0 0.0
    %1260 = vmatpush.xpose.msra.mxu0 0.0
    %1261 = vmatpush.xpose.msra.mxu0 0.0
    %1262 = vmatpush.xpose.msra.mxu0 0.0
    %1263 = vmatpush.xpose.msra.mxu0 0.0
    %1264 = vmatpush.xpose.msra.mxu0 0.0
    %1265 = vmatpush.xpose.msra.mxu0 0.0
    %1266 = vmatpush.xpose.msra.mxu0 0.0
    %1267 = vmatpush.xpose.msra.mxu0 0.0
    %1268 = vmatpush.xpose.msra.mxu0 %v1252
    %1269 = vmatpush.xpose.msra.mxu0 %v1250
    %1270 = vmatmul.f32.gmra.mxu0 %v1242
    %v1271 = vpop.f32.mrf.mxu0
    %v1272 = vadd.f32 0.0, %v1271
    %1273 = vmatmul.f32.gmra.mxu0 %v1244
    %v1274 = vpop.f32.mrf.mxu0
    %v1275 = vadd.f32 0.0, %v1274
    %1276 = vmatmul.f32.gmra.mxu0 %v1246
    %v1277 = vpop.f32.mrf.mxu0
    %v1278 = vadd.f32 0.0, %v1277
    %1279 = vmatmul.f32.gmra.mxu0 %v1248
    %v1280 = vpop.f32.mrf.mxu0
    %v1281 = vadd.f32 0.0, %v1280
    %1282 = vdwg.mxu0
    %1283 = vrot.lane.b32.xlu0 %v1150, 112
    %v1284 = vpop.permute.xlu0 %1283
    %1285 = vrot.lane.b32.xlu0 %v1151, 112
    %v1286 = vpop.permute.xlu0 %1285
    %1287 = vrot.lane.b32.xlu0 %v1152, 112
    %v1288 = vpop.permute.xlu0 %1287
    %1289 = vrot.lane.b32.xlu0 %v1153, 112
    %v1290 = vpop.permute.xlu0 %1289
    %1291 = vrot.lane.b32.xlu0 %v1178, 112
    %v1292 = vpop.permute.xlu0 %1291
    %1293 = vrot.lane.b32.xlu0 %v1181, 112
    %v1294 = vpop.permute.xlu0 %1293
    %v1295 = vsel %vm258, %v1284, 0
    %v1297 = vsel %vm258, %v1286, 0
    %v1299 = vsel %vm258, %v1288, 0
    %v1301 = vsel %vm258, %v1290, 0
    %v1303 = vsel %vm258, %v1292, 0
    %v1305 = vsel %vm258, %v1294, 0
    %1307 = vmatpush.xpose.msra.mxu0 0.0
    %1308 = vmatpush.xpose.msra.mxu0 0.0
    %1309 = vmatpush.xpose.msra.mxu0 0.0
    %1310 = vmatpush.xpose.msra.mxu0 0.0
    %1311 = vmatpush.xpose.msra.mxu0 0.0
    %1312 = vmatpush.xpose.msra.mxu0 0.0
    %1313 = vmatpush.xpose.msra.mxu0 0.0
    %1314 = vmatpush.xpose.msra.mxu0 0.0
    %1315 = vmatpush.xpose.msra.mxu0 0.0
    %1316 = vmatpush.xpose.msra.mxu0 0.0
    %1317 = vmatpush.xpose.msra.mxu0 0.0
    %1318 = vmatpush.xpose.msra.mxu0 0.0
    %1319 = vmatpush.xpose.msra.mxu0 0.0
    %1320 = vmatpush.xpose.msra.mxu0 0.0
    %1321 = vmatpush.xpose.msra.mxu0 %v1305
    %1322 = vmatpush.xpose.msra.mxu0 %v1303
    %1323 = vmatmul.f32.gmra.mxu0 %v1295
    %v1324 = vpop.f32.mrf.mxu0
    %v1325 = vadd.f32 0.0, %v1324
    %1326 = vmatmul.f32.gmra.mxu0 %v1297
    %v1327 = vpop.f32.mrf.mxu0
    %v1328 = vadd.f32 0.0, %v1327
    %1329 = vmatmul.f32.gmra.mxu0 %v1299
    %v1330 = vpop.f32.mrf.mxu0
    %v1331 = vadd.f32 0.0, %v1330
    %1332 = vmatmul.f32.gmra.mxu0 %v1301
    %v1333 = vpop.f32.mrf.mxu0
    %v1334 = vadd.f32 0.0, %v1333
    %1335 = vdwg.mxu0
    %1336 = vrot.lane.b32.xlu0 %v1150, 104
    %v1337 = vpop.permute.xlu0 %1336
    %1338 = vrot.lane.b32.xlu0 %v1151, 104
    %v1339 = vpop.permute.xlu0 %1338
    %1340 = vrot.lane.b32.xlu0 %v1152, 104
    %v1341 = vpop.permute.xlu0 %1340
    %1342 = vrot.lane.b32.xlu0 %v1153, 104
    %v1343 = vpop.permute.xlu0 %1342
    %1344 = vrot.lane.b32.xlu0 %v1178, 104
    %v1345 = vpop.permute.xlu0 %1344
    %1346 = vrot.lane.b32.xlu0 %v1181, 104
    %v1347 = vpop.permute.xlu0 %1346
    %v1348 = vsel %vm258, %v1337, 0
    %v1350 = vsel %vm258, %v1339, 0
    %v1352 = vsel %vm258, %v1341, 0
    %v1354 = vsel %vm258, %v1343, 0
    %v1356 = vsel %vm258, %v1345, 0
    %v1358 = vsel %vm258, %v1347, 0
    %1360 = vmatpush.xpose.msra.mxu0 0.0
    %1361 = vmatpush.xpose.msra.mxu0 0.0
    %1362 = vmatpush.xpose.msra.mxu0 0.0
    %1363 = vmatpush.xpose.msra.mxu0 0.0
    %1364 = vmatpush.xpose.msra.mxu0 0.0
    %1365 = vmatpush.xpose.msra.mxu0 0.0
    %1366 = vmatpush.xpose.msra.mxu0 0.0
    %1367 = vmatpush.xpose.msra.mxu0 0.0
    %1368 = vmatpush.xpose.msra.mxu0 0.0
    %1369 = vmatpush.xpose.msra.mxu0 0.0
    %1370 = vmatpush.xpose.msra.mxu0 0.0
    %1371 = vmatpush.xpose.msra.mxu0 0.0
    %1372 = vmatpush.xpose.msra.mxu0 0.0
    %1373 = vmatpush.xpose.msra.mxu0 0.0
    %1374 = vmatpush.xpose.msra.mxu0 %v1358
    %1375 = vmatpush.xpose.msra.mxu0 %v1356
    %1376 = vmatmul.f32.gmra.mxu0 %v1348
    %v1377 = vpop.f32.mrf.mxu0
    %v1378 = vadd.f32 0.0, %v1377
    %1379 = vmatmul.f32.gmra.mxu0 %v1350
    %v1380 = vpop.f32.mrf.mxu0
    %v1381 = vadd.f32 0.0, %v1380
    %1382 = vmatmul.f32.gmra.mxu0 %v1352
    %v1383 = vpop.f32.mrf.mxu0
    %v1384 = vadd.f32 0.0, %v1383
    %1385 = vmatmul.f32.gmra.mxu0 %v1354
    %v1386 = vpop.f32.mrf.mxu0
    %v1387 = vadd.f32 0.0, %v1386
    %1388 = vdwg.mxu0
    %v1389 = vsel %vm91, 1, 0
    %v1390 = vsel %vm92, 1, 0
    %v1391 = vsel %vm93, 1, 0
    %v1392 = vsel %vm94, 1, 0
    %vm1393 = vcmp.eq.s32.totalorder %v1389, 1
    %vm1394 = vcmp.eq.s32.totalorder %v1390, 1
    %vm1395 = vcmp.eq.s32.totalorder %v1391, 1
    %vm1396 = vcmp.eq.s32.totalorder %v1392, 1
    %v1397 = vsel %vm1393, %v1219, -1e+30
    %v1398 = vsel %vm1394, %v1222, -1e+30
    %v1399 = vsel %vm1395, %v1225, -1e+30
    %v1400 = vsel %vm1396, %v1228, -1e+30
    %v1401 = vsel %vm1393, %v1272, -1e+30
    %v1402 = vsel %vm1394, %v1275, -1e+30
    %v1403 = vsel %vm1395, %v1278, -1e+30
    %v1404 = vsel %vm1396, %v1281, -1e+30
    %v1405 = vsel %vm1393, %v1325, -1e+30
    %v1406 = vsel %vm1394, %v1328, -1e+30
    %v1407 = vsel %vm1395, %v1331, -1e+30
    %v1408 = vsel %vm1396, %v1334, -1e+30
    %v1409 = vsel %vm1393, %v1378, -1e+30
    %v1410 = vsel %vm1394, %v1381, -1e+30
    %v1411 = vsel %vm1395, %v1384, -1e+30
    %v1412 = vsel %vm1396, %v1387, -1e+30
    %v1413 = vsel %vm955, %v1397, -inf
    %1414 = vmax.xlane.f32.xlu0 %v1413
    %v1415 = vpop.xlane.xlu0 %1414
    %v1416 = vsel %vm955, %v1398, -inf
    %1417 = vmax.xlane.f32.xlu0 %v1416
    %v1418 = vpop.xlane.xlu0 %1417
    %v1419 = vsel %vm955, %v1399, -inf
    %1420 = vmax.xlane.f32.xlu0 %v1419
    %v1421 = vpop.xlane.xlu0 %1420
    %v1422 = vsel %vm955, %v1400, -inf
    %1423 = vmax.xlane.f32.xlu0 %v1422
    %v1424 = vpop.xlane.xlu0 %1423
    %v1425 = vsel %vm955, %v1401, -inf
    %1426 = vmax.xlane.f32.xlu0 %v1425
    %v1427 = vpop.xlane.xlu0 %1426
    %v1428 = vsel %vm955, %v1402, -inf
    %1429 = vmax.xlane.f32.xlu0 %v1428
    %v1430 = vpop.xlane.xlu0 %1429
    %v1431 = vsel %vm955, %v1403, -inf
    %1432 = vmax.xlane.f32.xlu0 %v1431
    %v1433 = vpop.xlane.xlu0 %1432
    %v1434 = vsel %vm955, %v1404, -inf
    %1435 = vmax.xlane.f32.xlu0 %v1434
    %v1436 = vpop.xlane.xlu0 %1435
    %v1437 = vsel %vm955, %v1405, -inf
    %1438 = vmax.xlane.f32.xlu0 %v1437
    %v1439 = vpop.xlane.xlu0 %1438
    %v1440 = vsel %vm955, %v1406, -inf
    %1441 = vmax.xlane.f32.xlu0 %v1440
    %v1442 = vpop.xlane.xlu0 %1441
    %v1443 = vsel %vm955, %v1407, -inf
    %1444 = vmax.xlane.f32.xlu0 %v1443
    %v1445 = vpop.xlane.xlu0 %1444
    %v1446 = vsel %vm955, %v1408, -inf
    %1447 = vmax.xlane.f32.xlu0 %v1446
    %v1448 = vpop.xlane.xlu0 %1447
    %v1449 = vsel %vm955, %v1409, -inf
    %1450 = vmax.xlane.f32.xlu0 %v1449
    %v1451 = vpop.xlane.xlu0 %1450
    %v1452 = vsel %vm955, %v1410, -inf
    %1453 = vmax.xlane.f32.xlu0 %v1452
    %v1454 = vpop.xlane.xlu0 %1453
    %v1455 = vsel %vm955, %v1411, -inf
    %1456 = vmax.xlane.f32.xlu0 %v1455
    %v1457 = vpop.xlane.xlu0 %1456
    %v1458 = vsel %vm955, %v1412, -inf
    %1459 = vmax.xlane.f32.xlu0 %v1458
    %v1460 = vpop.xlane.xlu0 %1459
    %v1461 = vsub.f32 %v1397, %v1415
    %v1462 = vsub.f32 %v1398, %v1418
    %v1463 = vsub.f32 %v1399, %v1421
    %v1464 = vsub.f32 %v1400, %v1424
    %v1465 = vsub.f32 %v1401, %v1427
    %v1466 = vsub.f32 %v1402, %v1430
    %v1467 = vsub.f32 %v1403, %v1433
    %v1468 = vsub.f32 %v1404, %v1436
    %v1469 = vsub.f32 %v1405, %v1439
    %v1470 = vsub.f32 %v1406, %v1442
    %v1471 = vsub.f32 %v1407, %v1445
    %v1472 = vsub.f32 %v1408, %v1448
    %v1473 = vsub.f32 %v1409, %v1451
    %v1474 = vsub.f32 %v1410, %v1454
    %v1475 = vsub.f32 %v1411, %v1457
    %v1476 = vsub.f32 %v1412, %v1460
    %v1477 = vmul.f32 %v1461, 1.442695
    %v1478 = vpow.pop %v1477
    %v1479 = vmul.f32 %v1462, 1.442695
    %v1480 = vpow.pop %v1479
    %v1481 = vmul.f32 %v1463, 1.442695
    %v1482 = vpow.pop %v1481
    %v1483 = vmul.f32 %v1464, 1.442695
    %v1484 = vpow.pop %v1483
    %v1485 = vmul.f32 %v1465, 1.442695
    %v1486 = vpow.pop %v1485
    %v1487 = vmul.f32 %v1466, 1.442695
    %v1488 = vpow.pop %v1487
    %v1489 = vmul.f32 %v1467, 1.442695
    %v1490 = vpow.pop %v1489
    %v1491 = vmul.f32 %v1468, 1.442695
    %v1492 = vpow.pop %v1491
    %v1493 = vmul.f32 %v1469, 1.442695
    %v1494 = vpow.pop %v1493
    %v1495 = vmul.f32 %v1470, 1.442695
    %v1496 = vpow.pop %v1495
    %v1497 = vmul.f32 %v1471, 1.442695
    %v1498 = vpow.pop %v1497
    %v1499 = vmul.f32 %v1472, 1.442695
    %v1500 = vpow.pop %v1499
    %v1501 = vmul.f32 %v1473, 1.442695
    %v1502 = vpow.pop %v1501
    %v1503 = vmul.f32 %v1474, 1.442695
    %v1504 = vpow.pop %v1503
    %v1505 = vmul.f32 %v1475, 1.442695
    %v1506 = vpow.pop %v1505
    %v1507 = vmul.f32 %v1476, 1.442695
    %v1508 = vpow.pop %v1507
    %v1509 = vsel %vm955, %v1478, 0.0
    %1510 = vadd.xlane.f32.xlu0 %v1509
    %v1511 = vpop.xlane.xlu0 %1510
    %v1512 = vsel %vm955, %v1480, 0.0
    %1513 = vadd.xlane.f32.xlu0 %v1512
    %v1514 = vpop.xlane.xlu0 %1513
    %v1515 = vsel %vm955, %v1482, 0.0
    %1516 = vadd.xlane.f32.xlu0 %v1515
    %v1517 = vpop.xlane.xlu0 %1516
    %v1518 = vsel %vm955, %v1484, 0.0
    %1519 = vadd.xlane.f32.xlu0 %v1518
    %v1520 = vpop.xlane.xlu0 %1519
    %v1521 = vsel %vm955, %v1486, 0.0
    %1522 = vadd.xlane.f32.xlu0 %v1521
    %v1523 = vpop.xlane.xlu0 %1522
    %v1524 = vsel %vm955, %v1488, 0.0
    %1525 = vadd.xlane.f32.xlu0 %v1524
    %v1526 = vpop.xlane.xlu0 %1525
    %v1527 = vsel %vm955, %v1490, 0.0
    %1528 = vadd.xlane.f32.xlu0 %v1527
    %v1529 = vpop.xlane.xlu0 %1528
    %v1530 = vsel %vm955, %v1492, 0.0
    %1531 = vadd.xlane.f32.xlu0 %v1530
    %v1532 = vpop.xlane.xlu0 %1531
    %v1533 = vsel %vm955, %v1494, 0.0
    %1534 = vadd.xlane.f32.xlu0 %v1533
    %v1535 = vpop.xlane.xlu0 %1534
    %v1536 = vsel %vm955, %v1496, 0.0
    %1537 = vadd.xlane.f32.xlu0 %v1536
    %v1538 = vpop.xlane.xlu0 %1537
    %v1539 = vsel %vm955, %v1498, 0.0
    %1540 = vadd.xlane.f32.xlu0 %v1539
    %v1541 = vpop.xlane.xlu0 %1540
    %v1542 = vsel %vm955, %v1500, 0.0
    %1543 = vadd.xlane.f32.xlu0 %v1542
    %v1544 = vpop.xlane.xlu0 %1543
    %v1545 = vsel %vm955, %v1502, 0.0
    %1546 = vadd.xlane.f32.xlu0 %v1545
    %v1547 = vpop.xlane.xlu0 %1546
    %v1548 = vsel %vm955, %v1504, 0.0
    %1549 = vadd.xlane.f32.xlu0 %v1548
    %v1550 = vpop.xlane.xlu0 %1549
    %v1551 = vsel %vm955, %v1506, 0.0
    %1552 = vadd.xlane.f32.xlu0 %v1551
    %v1553 = vpop.xlane.xlu0 %1552
    %v1554 = vsel %vm955, %v1508, 0.0
    %1555 = vadd.xlane.f32.xlu0 %v1554
    %v1556 = vpop.xlane.xlu0 %1555
    %v1557 = vrcp.pop %v1511
    %v1558 = vrcp.pop %v1514
    %v1559 = vrcp.pop %v1517
    %v1560 = vrcp.pop %v1520
    %v1561 = vrcp.pop %v1523
    %v1562 = vrcp.pop %v1526
    %v1563 = vrcp.pop %v1529
    %v1564 = vrcp.pop %v1532
    %v1565 = vrcp.pop %v1535
    %v1566 = vrcp.pop %v1538
    %v1567 = vrcp.pop %v1541
    %v1568 = vrcp.pop %v1544
    %v1569 = vrcp.pop %v1547
    %v1570 = vrcp.pop %v1550
    %v1571 = vrcp.pop %v1553
    %v1572 = vrcp.pop %v1556
    %v1573 = vmul.f32 %v1478, %v1557
    %v1574 = vmul.f32 %v1480, %v1558
    %v1575 = vmul.f32 %v1482, %v1559
    %v1576 = vmul.f32 %v1484, %v1560
    %v1577 = vmul.f32 %v1486, %v1561
    %v1578 = vmul.f32 %v1488, %v1562
    %v1579 = vmul.f32 %v1490, %v1563
    %v1580 = vmul.f32 %v1492, %v1564
    %v1581 = vmul.f32 %v1494, %v1565
    %v1582 = vmul.f32 %v1496, %v1566
    %v1583 = vmul.f32 %v1498, %v1567
    %v1584 = vmul.f32 %v1500, %v1568
    %v1585 = vmul.f32 %v1502, %v1569
    %v1586 = vmul.f32 %v1504, %v1570
    %v1587 = vmul.f32 %v1506, %v1571
    %v1588 = vmul.f32 %v1508, %v1572
    %1589 = vrot.lane.b32.xlu0 %v1178, 96
    %v1590 = vpop.permute.xlu0 %1589
    %1591 = vrot.lane.b32.xlu0 %v1181, 96
    %v1592 = vpop.permute.xlu0 %1591
    %v1596 = vsel %vm955, %v1573, 0
    %v1599 = vsel %vm955, %v1574, 0
    %v1602 = vsel %vm955, %v1575, 0
    %v1605 = vsel %vm955, %v1576, 0
    %1607 = vmatpush.msra.mxu0 0.0
    %1608 = vmatpush.msra.mxu0 0.0
    %1609 = vmatpush.msra.mxu0 0.0
    %1610 = vmatpush.msra.mxu0 0.0
    %1611 = vmatpush.msra.mxu0 0.0
    %1612 = vmatpush.msra.mxu0 0.0
    %1613 = vmatpush.msra.mxu0 0.0
    %1614 = vmatpush.msra.mxu0 0.0
    %1615 = vmatpush.msra.mxu0 0.0
    %1616 = vmatpush.msra.mxu0 0.0
    %1617 = vmatpush.msra.mxu0 0.0
    %1618 = vmatpush.msra.mxu0 0.0
    %1619 = vmatpush.msra.mxu0 0.0
    %1620 = vmatpush.msra.mxu0 0.0
    %1621 = vmatpush.msra.mxu0 %v1592
    %1622 = vmatpush.msra.mxu0 %v1590
    %1623 = vmatmul.f32.gmra.mxu0 %v1596
    %v1624 = vpop.f32.mrf.mxu0
    %v1625 = vadd.f32 0.0, %v1624
    %1626 = vmatmul.f32.gmra.mxu0 %v1599
    %v1627 = vpop.f32.mrf.mxu0
    %v1628 = vadd.f32 0.0, %v1627
    %1629 = vmatmul.f32.gmra.mxu0 %v1602
    %v1630 = vpop.f32.mrf.mxu0
    %v1631 = vadd.f32 0.0, %v1630
    %1632 = vmatmul.f32.gmra.mxu0 %v1605
    %v1633 = vpop.f32.mrf.mxu0
    %v1634 = vadd.f32 0.0, %v1633
    %1635 = vdwg.mxu0
    %1636 = vrot.lane.b32.xlu0 %v1178, 88
    %v1637 = vpop.permute.xlu0 %1636
    %1638 = vrot.lane.b32.xlu0 %v1181, 88
    %v1639 = vpop.permute.xlu0 %1638
    %v1643 = vsel %vm955, %v1577, 0
    %v1646 = vsel %vm955, %v1578, 0
    %v1649 = vsel %vm955, %v1579, 0
    %v1652 = vsel %vm955, %v1580, 0
    %1654 = vmatpush.msra.mxu0 0.0
    %1655 = vmatpush.msra.mxu0 0.0
    %1656 = vmatpush.msra.mxu0 0.0
    %1657 = vmatpush.msra.mxu0 0.0
    %1658 = vmatpush.msra.mxu0 0.0
    %1659 = vmatpush.msra.mxu0 0.0
    %1660 = vmatpush.msra.mxu0 0.0
    %1661 = vmatpush.msra.mxu0 0.0
    %1662 = vmatpush.msra.mxu0 0.0
    %1663 = vmatpush.msra.mxu0 0.0
    %1664 = vmatpush.msra.mxu0 0.0
    %1665 = vmatpush.msra.mxu0 0.0
    %1666 = vmatpush.msra.mxu0 0.0
    %1667 = vmatpush.msra.mxu0 0.0
    %1668 = vmatpush.msra.mxu0 %v1639
    %1669 = vmatpush.msra.mxu0 %v1637
    %1670 = vmatmul.f32.gmra.mxu0 %v1643
    %v1671 = vpop.f32.mrf.mxu0
    %v1672 = vadd.f32 0.0, %v1671
    %1673 = vmatmul.f32.gmra.mxu0 %v1646
    %v1674 = vpop.f32.mrf.mxu0
    %v1675 = vadd.f32 0.0, %v1674
    %1676 = vmatmul.f32.gmra.mxu0 %v1649
    %v1677 = vpop.f32.mrf.mxu0
    %v1678 = vadd.f32 0.0, %v1677
    %1679 = vmatmul.f32.gmra.mxu0 %v1652
    %v1680 = vpop.f32.mrf.mxu0
    %v1681 = vadd.f32 0.0, %v1680
    %1682 = vdwg.mxu0
    %1683 = vrot.lane.b32.xlu0 %v1178, 80
    %v1684 = vpop.permute.xlu0 %1683
    %1685 = vrot.lane.b32.xlu0 %v1181, 80
    %v1686 = vpop.permute.xlu0 %1685
    %v1690 = vsel %vm955, %v1581, 0
    %v1693 = vsel %vm955, %v1582, 0
    %v1696 = vsel %vm955, %v1583, 0
    %v1699 = vsel %vm955, %v1584, 0
    %1701 = vmatpush.msra.mxu0 0.0
    %1702 = vmatpush.msra.mxu0 0.0
    %1703 = vmatpush.msra.mxu0 0.0
    %1704 = vmatpush.msra.mxu0 0.0
    %1705 = vmatpush.msra.mxu0 0.0
    %1706 = vmatpush.msra.mxu0 0.0
    %1707 = vmatpush.msra.mxu0 0.0
    %1708 = vmatpush.msra.mxu0 0.0
    %1709 = vmatpush.msra.mxu0 0.0
    %1710 = vmatpush.msra.mxu0 0.0
    %1711 = vmatpush.msra.mxu0 0.0
    %1712 = vmatpush.msra.mxu0 0.0
    %1713 = vmatpush.msra.mxu0 0.0
    %1714 = vmatpush.msra.mxu0 0.0
    %1715 = vmatpush.msra.mxu0 %v1686
    %1716 = vmatpush.msra.mxu0 %v1684
    %1717 = vmatmul.f32.gmra.mxu0 %v1690
    %v1718 = vpop.f32.mrf.mxu0
    %v1719 = vadd.f32 0.0, %v1718
    %1720 = vmatmul.f32.gmra.mxu0 %v1693
    %v1721 = vpop.f32.mrf.mxu0
    %v1722 = vadd.f32 0.0, %v1721
    %1723 = vmatmul.f32.gmra.mxu0 %v1696
    %v1724 = vpop.f32.mrf.mxu0
    %v1725 = vadd.f32 0.0, %v1724
    %1726 = vmatmul.f32.gmra.mxu0 %v1699
    %v1727 = vpop.f32.mrf.mxu0
    %v1728 = vadd.f32 0.0, %v1727
    %1729 = vdwg.mxu0
    %1730 = vrot.lane.b32.xlu0 %v1178, 72
    %v1731 = vpop.permute.xlu0 %1730
    %1732 = vrot.lane.b32.xlu0 %v1181, 72
    %v1733 = vpop.permute.xlu0 %1732
    %v1737 = vsel %vm955, %v1585, 0
    %v1740 = vsel %vm955, %v1586, 0
    %v1743 = vsel %vm955, %v1587, 0
    %v1746 = vsel %vm955, %v1588, 0
    %1748 = vmatpush.msra.mxu0 0.0
    %1749 = vmatpush.msra.mxu0 0.0
    %1750 = vmatpush.msra.mxu0 0.0
    %1751 = vmatpush.msra.mxu0 0.0
    %1752 = vmatpush.msra.mxu0 0.0
    %1753 = vmatpush.msra.mxu0 0.0
    %1754 = vmatpush.msra.mxu0 0.0
    %1755 = vmatpush.msra.mxu0 0.0
    %1756 = vmatpush.msra.mxu0 0.0
    %1757 = vmatpush.msra.mxu0 0.0
    %1758 = vmatpush.msra.mxu0 0.0
    %1759 = vmatpush.msra.mxu0 0.0
    %1760 = vmatpush.msra.mxu0 0.0
    %1761 = vmatpush.msra.mxu0 0.0
    %1762 = vmatpush.msra.mxu0 %v1733
    %1763 = vmatpush.msra.mxu0 %v1731
    %1764 = vmatmul.f32.gmra.mxu0 %v1737
    %v1765 = vpop.f32.mrf.mxu0
    %v1766 = vadd.f32 0.0, %v1765
    %1767 = vmatmul.f32.gmra.mxu0 %v1740
    %v1768 = vpop.f32.mrf.mxu0
    %v1769 = vadd.f32 0.0, %v1768
    %1770 = vmatmul.f32.gmra.mxu0 %v1743
    %v1771 = vpop.f32.mrf.mxu0
    %v1772 = vadd.f32 0.0, %v1771
    %1773 = vmatmul.f32.gmra.mxu0 %v1746
    %v1774 = vpop.f32.mrf.mxu0
    %v1775 = vadd.f32 0.0, %v1774
    %1776 = vdwg.mxu0
    %1781 = vrot.lane.b32.xlu0 %v1672, 8
    %v1782 = vpop.permute.xlu0 %1781
    %1783 = vrot.lane.b32.xlu0 %v1675, 8
    %v1784 = vpop.permute.xlu0 %1783
    %1785 = vrot.lane.b32.xlu0 %v1678, 8
    %v1786 = vpop.permute.xlu0 %1785
    %1787 = vrot.lane.b32.xlu0 %v1681, 8
    %v1788 = vpop.permute.xlu0 %1787
    %1797 = vrot.lane.b32.xlu0 %v1719, 16
    %v1798 = vpop.permute.xlu0 %1797
    %1799 = vrot.lane.b32.xlu0 %v1722, 16
    %v1800 = vpop.permute.xlu0 %1799
    %1801 = vrot.lane.b32.xlu0 %v1725, 16
    %v1802 = vpop.permute.xlu0 %1801
    %1803 = vrot.lane.b32.xlu0 %v1728, 16
    %v1804 = vpop.permute.xlu0 %1803
    %1813 = vrot.lane.b32.xlu0 %v1766, 24
    %v1814 = vpop.permute.xlu0 %1813
    %1815 = vrot.lane.b32.xlu0 %v1769, 24
    %v1816 = vpop.permute.xlu0 %1815
    %1817 = vrot.lane.b32.xlu0 %v1772, 24
    %v1818 = vpop.permute.xlu0 %1817
    %1819 = vrot.lane.b32.xlu0 %v1775, 24
    %v1820 = vpop.permute.xlu0 %1819
    %v1825 = vsel %vm258, %v1625, %v1782
    %v1826 = vsel %vm258, %v1628, %v1784
    %v1827 = vsel %vm258, %v1631, %v1786
    %v1828 = vsel %vm258, %v1634, %v1788
    %v1829 = vsel %vm955, %v1825, %v1798
    %v1830 = vsel %vm955, %v1826, %v1800
    %v1831 = vsel %vm955, %v1827, %v1802
    %v1832 = vsel %vm955, %v1828, %v1804
    %v1833 = vsel %vm960, %v1829, %v1814
    %v1834 = vsel %vm960, %v1830, %v1816
    %v1835 = vsel %vm960, %v1831, %v1818
    %v1836 = vsel %vm960, %v1832, %v1820
    %v1837 = vperm.slane %v68, 0
    %v1839 = vsel %vm95, %v1833, 0
    %v1842 = vsel %vm95, %v1834, 0
    %v1845 = vsel %vm95, %v1835, 0
    %v1848 = vsel %vm95, %v1836, 0
    %1850 = vmatpush.msra.mxu0 0.0
    %1851 = vmatpush.msra.mxu0 0.0
    %1852 = vmatpush.msra.mxu0 0.0
    %1853 = vmatpush.msra.mxu0 0.0
    %1854 = vmatpush.msra.mxu0 0.0
    %1855 = vmatpush.msra.mxu0 0.0
    %1856 = vmatpush.msra.mxu0 0.0
    %1857 = vmatpush.msra.mxu0 0.0
    %1858 = vmatpush.msra.mxu0 0.0
    %1859 = vmatpush.msra.mxu0 0.0
    %1860 = vmatpush.msra.mxu0 0.0
    %1861 = vmatpush.msra.mxu0 0.0
    %1862 = vmatpush.msra.mxu0 %v38
    %1863 = vmatpush.msra.mxu0 %v37
    %1864 = vmatpush.msra.mxu0 %v36
    %1865 = vmatpush.msra.mxu0 %v35
    %1866 = vmatmul.f32.gmra.mxu0 %v1839
    %v1867 = vpop.f32.mrf.mxu0
    %v1868 = vadd.f32 %v1837, %v1867
    %1869 = vmatmul.f32.gmra.mxu0 %v1842
    %v1870 = vpop.f32.mrf.mxu0
    %v1871 = vadd.f32 %v1837, %v1870
    %1872 = vmatmul.f32.gmra.mxu0 %v1845
    %v1873 = vpop.f32.mrf.mxu0
    %v1874 = vadd.f32 %v1837, %v1873
    %1875 = vmatmul.f32.gmra.mxu0 %v1848
    %v1876 = vpop.f32.mrf.mxu0
    %v1877 = vadd.f32 %v1837, %v1876
    %1878 = vdwg.mxu0
    %v1879 = vadd.f32 %v1007, %v1868
    %v1880 = vadd.f32 %v1008, %v1871
    %v1881 = vadd.f32 %v1009, %v1874
    %v1882 = vadd.f32 %v1010, %v1877
    %v1883 = vsel %vm95, %v1879, 0.0
    %1884 = vadd.xlane.f32.xlu0 %v1883
    %v1885 = vpop.xlane.xlu0 %1884
    %v1886 = vsel %vm95, %v1880, 0.0
    %1887 = vadd.xlane.f32.xlu0 %v1886
    %v1888 = vpop.xlane.xlu0 %1887
    %v1889 = vsel %vm95, %v1881, 0.0
    %1890 = vadd.xlane.f32.xlu0 %v1889
    %v1891 = vpop.xlane.xlu0 %1890
    %v1892 = vsel %vm95, %v1882, 0.0
    %1893 = vadd.xlane.f32.xlu0 %v1892
    %v1894 = vpop.xlane.xlu0 %1893
    %v1895 = vmul.f32 %v1885, %v114
    %v1896 = vmul.f32 %v1888, %v114
    %v1897 = vmul.f32 %v1891, %v114
    %v1898 = vmul.f32 %v1894, %v114
    %v1899 = vsub.f32 %v1879, %v1895
    %v1900 = vsub.f32 %v1880, %v1896
    %v1901 = vsub.f32 %v1881, %v1897
    %v1902 = vsub.f32 %v1882, %v1898
    %v1903 = vmul.f32 %v1899, %v1899
    %v1904 = vmul.f32 %v1900, %v1900
    %v1905 = vmul.f32 %v1901, %v1901
    %v1906 = vmul.f32 %v1902, %v1902
    %v1907 = vsel %vm95, %v1903, 0.0
    %1908 = vadd.xlane.f32.xlu0 %v1907
    %v1909 = vpop.xlane.xlu0 %1908
    %v1910 = vsel %vm95, %v1904, 0.0
    %1911 = vadd.xlane.f32.xlu0 %v1910
    %v1912 = vpop.xlane.xlu0 %1911
    %v1913 = vsel %vm95, %v1905, 0.0
    %1914 = vadd.xlane.f32.xlu0 %v1913
    %v1915 = vpop.xlane.xlu0 %1914
    %v1916 = vsel %vm95, %v1906, 0.0
    %1917 = vadd.xlane.f32.xlu0 %v1916
    %v1918 = vpop.xlane.xlu0 %1917
    %v1919 = vmul.f32 %v1909, %v114
    %v1920 = vmul.f32 %v1912, %v114
    %v1921 = vmul.f32 %v1915, %v114
    %v1922 = vmul.f32 %v1918, %v114
    %v1923 = vadd.f32 %v1919, 1e-05
    %v1924 = vadd.f32 %v1920, 1e-05
    %v1925 = vadd.f32 %v1921, 1e-05
    %v1926 = vadd.f32 %v1922, 1e-05
    %v1927 = vrsqrt.pop %v1923
    %v1928 = vmul.f32 %v1927, %v1923
    %v1929 = vmul.f32 %v1928, %v1927
    %v1930 = vmul.f32 0.5, %v1929
    %v1931 = vsub.f32 1.5, %v1930
    %v1932 = vmul.f32 %v1927, %v1931
    %vm1933 = vweird.f32 %v1923
    %vm1934 = vweird.f32 %v1927
    %vm1935 = vmor %vm1933, %vm1934
    %v1936 = vsel %vm1935, %v1927, %v1932
    %v1937 = vrsqrt.pop %v1924
    %v1938 = vmul.f32 %v1937, %v1924
    %v1939 = vmul.f32 %v1938, %v1937
    %v1940 = vmul.f32 0.5, %v1939
    %v1941 = vsub.f32 1.5, %v1940
    %v1942 = vmul.f32 %v1937, %v1941
    %vm1943 = vweird.f32 %v1924
    %vm1944 = vweird.f32 %v1937
    %vm1945 = vmor %vm1943, %vm1944
    %v1946 = vsel %vm1945, %v1937, %v1942
    %v1947 = vrsqrt.pop %v1925
    %v1948 = vmul.f32 %v1947, %v1925
    %v1949 = vmul.f32 %v1948, %v1947
    %v1950 = vmul.f32 0.5, %v1949
    %v1951 = vsub.f32 1.5, %v1950
    %v1952 = vmul.f32 %v1947, %v1951
    %vm1953 = vweird.f32 %v1925
    %vm1954 = vweird.f32 %v1947
    %vm1955 = vmor %vm1953, %vm1954
    %v1956 = vsel %vm1955, %v1947, %v1952
    %v1957 = vrsqrt.pop %v1926
    %v1958 = vmul.f32 %v1957, %v1926
    %v1959 = vmul.f32 %v1958, %v1957
    %v1960 = vmul.f32 0.5, %v1959
    %v1961 = vsub.f32 1.5, %v1960
    %v1962 = vmul.f32 %v1957, %v1961
    %vm1963 = vweird.f32 %v1926
    %vm1964 = vweird.f32 %v1957
    %vm1965 = vmor %vm1963, %vm1964
    %v1966 = vsel %vm1965, %v1957, %v1962
    %v1967 = vmul.f32 %v1899, %v1936
    %v1968 = vmul.f32 %v1900, %v1946
    %v1969 = vmul.f32 %v1901, %v1956
    %v1970 = vmul.f32 %v1902, %v1966
    %v1971 = vperm.slane %v69, 0
    %v1972 = vmul.f32 %v1967, %v1971
    %v1973 = vmul.f32 %v1968, %v1971
    %v1974 = vmul.f32 %v1969, %v1971
    %v1975 = vmul.f32 %v1970, %v1971
    %v1976 = vperm.slane %v70, 0
    %v1977 = vadd.f32 %v1972, %v1976
    %v1978 = vadd.f32 %v1973, %v1976
    %v1979 = vadd.f32 %v1974, %v1976
    %v1980 = vadd.f32 %v1975, %v1976
    %v1981 = vperm.slane %v71, 0
    %v1983 = vsel %vm95, %v1977, 0
    %v1986 = vsel %vm95, %v1978, 0
    %v1989 = vsel %vm95, %v1979, 0
    %v1992 = vsel %vm95, %v1980, 0
    %1994 = vmatpush.msra.mxu0 0.0
    %1995 = vmatpush.msra.mxu0 0.0
    %1996 = vmatpush.msra.mxu0 0.0
    %1997 = vmatpush.msra.mxu0 0.0
    %1998 = vmatpush.msra.mxu0 0.0
    %1999 = vmatpush.msra.mxu0 0.0
    %2000 = vmatpush.msra.mxu0 0.0
    %2001 = vmatpush.msra.mxu0 0.0
    %2002 = vmatpush.msra.mxu0 0.0
    %2003 = vmatpush.msra.mxu0 0.0
    %2004 = vmatpush.msra.mxu0 0.0
    %2005 = vmatpush.msra.mxu0 0.0
    %2006 = vmatpush.msra.mxu0 %v42
    %2007 = vmatpush.msra.mxu0 %v41
    %2008 = vmatpush.msra.mxu0 %v40
    %2009 = vmatpush.msra.mxu0 %v39
    %2010 = vmatmul.f32.gmra.mxu0 %v1983
    %v2011 = vpop.f32.mrf.mxu0
    %v2012 = vadd.f32 %v1981, %v2011
    %2013 = vmatmul.f32.gmra.mxu0 %v1986
    %v2014 = vpop.f32.mrf.mxu0
    %v2015 = vadd.f32 %v1981, %v2014
    %2016 = vmatmul.f32.gmra.mxu0 %v1989
    %v2017 = vpop.f32.mrf.mxu0
    %v2018 = vadd.f32 %v1981, %v2017
    %2019 = vmatmul.f32.gmra.mxu0 %v1992
    %v2020 = vpop.f32.mrf.mxu0
    %v2021 = vadd.f32 %v1981, %v2020
    %2022 = vdwg.mxu0
    %v2023 = vperm.slane %v72, 0
    %2024 = vmatpush.msra.mxu0 0.0
    %2025 = vmatpush.msra.mxu0 0.0
    %2026 = vmatpush.msra.mxu0 0.0
    %2027 = vmatpush.msra.mxu0 0.0
    %2028 = vmatpush.msra.mxu0 0.0
    %2029 = vmatpush.msra.mxu0 0.0
    %2030 = vmatpush.msra.mxu0 0.0
    %2031 = vmatpush.msra.mxu0 0.0
    %2032 = vmatpush.msra.mxu0 0.0
    %2033 = vmatpush.msra.mxu0 0.0
    %2034 = vmatpush.msra.mxu0 0.0
    %2035 = vmatpush.msra.mxu0 0.0
    %2036 = vmatpush.msra.mxu0 %v46
    %2037 = vmatpush.msra.mxu0 %v45
    %2038 = vmatpush.msra.mxu0 %v44
    %2039 = vmatpush.msra.mxu0 %v43
    %2040 = vmatmul.f32.gmra.mxu0 %v1983
    %v2041 = vpop.f32.mrf.mxu0
    %v2042 = vadd.f32 %v2023, %v2041
    %2043 = vmatmul.f32.gmra.mxu0 %v1986
    %v2044 = vpop.f32.mrf.mxu0
    %v2045 = vadd.f32 %v2023, %v2044
    %2046 = vmatmul.f32.gmra.mxu0 %v1989
    %v2047 = vpop.f32.mrf.mxu0
    %v2048 = vadd.f32 %v2023, %v2047
    %2049 = vmatmul.f32.gmra.mxu0 %v1992
    %v2050 = vpop.f32.mrf.mxu0
    %v2051 = vadd.f32 %v2023, %v2050
    %2052 = vdwg.mxu0
    %v2053 = vmul.f32 %v2042, 0.5
    %v2054 = vmul.f32 %v2045, 0.5
    %v2055 = vmul.f32 %v2048, 0.5
    %v2056 = vmul.f32 %v2051, 0.5
    %v2057 = vmul.f32 %v2042, 0.70710677
    %v2058 = vmul.f32 %v2045, 0.70710677
    %v2059 = vmul.f32 %v2048, 0.70710677
    %v2060 = vmul.f32 %v2051, 0.70710677
    %v2061 = vmul.f32 %v2057, %v2057
    %v2062 = vmin.f32 16.0, %v2061
    %v2063 = vmul.f32 %v2062, 2.1237322e-06
    %v2064 = vadd.f32 %v2063, 0.00028619796
    %v2065 = vmul.f32 %v2062, %v2064
    %v2066 = vadd.f32 %v2065, 0.0036580483
    %v2067 = vmul.f32 %v2062, %v2066
    %v2068 = vadd.f32 %v2067, 0.05243302
    %v2069 = vmul.f32 %v2062, %v2068
    %v2070 = vadd.f32 %v2069, 0.18741608
    %v2071 = vmul.f32 %v2062, %v2070
    %v2072 = vadd.f32 %v2071, 1.1283791
    %v2073 = vmul.f32 %v2057, %v2072
    %v2074 = vmul.f32 %v2062, 3.8918573e-05
    %v2075 = vadd.f32 %v2074, 0.001143296
    %v2076 = vmul.f32 %v2062, %v2075
    %v2077 = vadd.f32 %v2076, 0.014752088
    %v2078 = vmul.f32 %v2062, %v2077
    %v2079 = vadd.f32 %v2078, 0.112945676
    %v2080 = vmul.f32 %v2062, %v2079
    %v2081 = vadd.f32 %v2080, 0.4994258
    %v2082 = vmul.f32 %v2062, %v2081
    %v2083 = vadd.f32 %v2082, 1.0
    %v2084 = vrcp.pop %v2083
    %v2085 = vmul.f32 %v2083, %v2084
    %v2086 = vsub.f32 1.0, %v2085
    %v2087 = vmul.f32 %v2084, %v2086
    %v2088 = vadd.f32 %v2084, %v2087
    %vm2089 = vweird.f32 %v2083
    %vm2090 = vweird.f32 %v2084
    %vm2091 = vmor %vm2089, %vm2090
    %v2092 = vsel %vm2091, %v2084, %v2088
    %v2093 = vand.u32 2147483647, %v2083
    %vm2094 = vcmp.eq.f32.partialorder %v2093, 8.507059e+37
    %v2095 = vand.u32 %v2083, 2147483648
    %v2096 = vor.u32 1.1754944e-38, %v2095
    %v2097 = vsel %vm2094, %v2096, %v2092
    %v2098 = vmul.f32 %v2073, %v2097
    %v2099 = vmin.f32 %v2098, 1.0
    %v2100 = vmax.f32 %v2099, -1.0
    %v2101 = vmul.f32 %v2058, %v2058
    %v2102 = vmin.f32 16.0, %v2101
    %v2103 = vmul.f32 %v2102, 2.1237322e-06
    %v2104 = vadd.f32 %v2103, 0.00028619796
    %v2105 = vmul.f32 %v2102, %v2104
    %v2106 = vadd.f32 %v2105, 0.0036580483
    %v2107 = vmul.f32 %v2102, %v2106
    %v2108 = vadd.f32 %v2107, 0.05243302
    %v2109 = vmul.f32 %v2102, %v2108
    %v2110 = vadd.f32 %v2109, 0.18741608
    %v2111 = vmul.f32 %v2102, %v2110
    %v2112 = vadd.f32 %v2111, 1.1283791
    %v2113 = vmul.f32 %v2058, %v2112
    %v2114 = vmul.f32 %v2102, 3.8918573e-05
    %v2115 = vadd.f32 %v2114, 0.001143296
    %v2116 = vmul.f32 %v2102, %v2115
    %v2117 = vadd.f32 %v2116, 0.014752088
    %v2118 = vmul.f32 %v2102, %v2117
    %v2119 = vadd.f32 %v2118, 0.112945676
    %v2120 = vmul.f32 %v2102, %v2119
    %v2121 = vadd.f32 %v2120, 0.4994258
    %v2122 = vmul.f32 %v2102, %v2121
    %v2123 = vadd.f32 %v2122, 1.0
    %v2124 = vrcp.pop %v2123
    %v2125 = vmul.f32 %v2123, %v2124
    %v2126 = vsub.f32 1.0, %v2125
    %v2127 = vmul.f32 %v2124, %v2126
    %v2128 = vadd.f32 %v2124, %v2127
    %vm2129 = vweird.f32 %v2123
    %vm2130 = vweird.f32 %v2124
    %vm2131 = vmor %vm2129, %vm2130
    %v2132 = vsel %vm2131, %v2124, %v2128
    %v2133 = vand.u32 2147483647, %v2123
    %vm2134 = vcmp.eq.f32.partialorder %v2133, 8.507059e+37
    %v2135 = vand.u32 %v2123, 2147483648
    %v2136 = vor.u32 1.1754944e-38, %v2135
    %v2137 = vsel %vm2134, %v2136, %v2132
    %v2138 = vmul.f32 %v2113, %v2137
    %v2139 = vmin.f32 %v2138, 1.0
    %v2140 = vmax.f32 %v2139, -1.0
    %v2141 = vmul.f32 %v2059, %v2059
    %v2142 = vmin.f32 16.0, %v2141
    %v2143 = vmul.f32 %v2142, 2.1237322e-06
    %v2144 = vadd.f32 %v2143, 0.00028619796
    %v2145 = vmul.f32 %v2142, %v2144
    %v2146 = vadd.f32 %v2145, 0.0036580483
    %v2147 = vmul.f32 %v2142, %v2146
    %v2148 = vadd.f32 %v2147, 0.05243302
    %v2149 = vmul.f32 %v2142, %v2148
    %v2150 = vadd.f32 %v2149, 0.18741608
    %v2151 = vmul.f32 %v2142, %v2150
    %v2152 = vadd.f32 %v2151, 1.1283791
    %v2153 = vmul.f32 %v2059, %v2152
    %v2154 = vmul.f32 %v2142, 3.8918573e-05
    %v2155 = vadd.f32 %v2154, 0.001143296
    %v2156 = vmul.f32 %v2142, %v2155
    %v2157 = vadd.f32 %v2156, 0.014752088
    %v2158 = vmul.f32 %v2142, %v2157
    %v2159 = vadd.f32 %v2158, 0.112945676
    %v2160 = vmul.f32 %v2142, %v2159
    %v2161 = vadd.f32 %v2160, 0.4994258
    %v2162 = vmul.f32 %v2142, %v2161
    %v2163 = vadd.f32 %v2162, 1.0
    %v2164 = vrcp.pop %v2163
    %v2165 = vmul.f32 %v2163, %v2164
    %v2166 = vsub.f32 1.0, %v2165
    %v2167 = vmul.f32 %v2164, %v2166
    %v2168 = vadd.f32 %v2164, %v2167
    %vm2169 = vweird.f32 %v2163
    %vm2170 = vweird.f32 %v2164
    %vm2171 = vmor %vm2169, %vm2170
    %v2172 = vsel %vm2171, %v2164, %v2168
    %v2173 = vand.u32 2147483647, %v2163
    %vm2174 = vcmp.eq.f32.partialorder %v2173, 8.507059e+37
    %v2175 = vand.u32 %v2163, 2147483648
    %v2176 = vor.u32 1.1754944e-38, %v2175
    %v2177 = vsel %vm2174, %v2176, %v2172
    %v2178 = vmul.f32 %v2153, %v2177
    %v2179 = vmin.f32 %v2178, 1.0
    %v2180 = vmax.f32 %v2179, -1.0
    %v2181 = vmul.f32 %v2060, %v2060
    %v2182 = vmin.f32 16.0, %v2181
    %v2183 = vmul.f32 %v2182, 2.1237322e-06
    %v2184 = vadd.f32 %v2183, 0.00028619796
    %v2185 = vmul.f32 %v2182, %v2184
    %v2186 = vadd.f32 %v2185, 0.0036580483
    %v2187 = vmul.f32 %v2182, %v2186
    %v2188 = vadd.f32 %v2187, 0.05243302
    %v2189 = vmul.f32 %v2182, %v2188
    %v2190 = vadd.f32 %v2189, 0.18741608
    %v2191 = vmul.f32 %v2182, %v2190
    %v2192 = vadd.f32 %v2191, 1.1283791
    %v2193 = vmul.f32 %v2060, %v2192
    %v2194 = vmul.f32 %v2182, 3.8918573e-05
    %v2195 = vadd.f32 %v2194, 0.001143296
    %v2196 = vmul.f32 %v2182, %v2195
    %v2197 = vadd.f32 %v2196, 0.014752088
    %v2198 = vmul.f32 %v2182, %v2197
    %v2199 = vadd.f32 %v2198, 0.112945676
    %v2200 = vmul.f32 %v2182, %v2199
    %v2201 = vadd.f32 %v2200, 0.4994258
    %v2202 = vmul.f32 %v2182, %v2201
    %v2203 = vadd.f32 %v2202, 1.0
    %v2204 = vrcp.pop %v2203
    %v2205 = vmul.f32 %v2203, %v2204
    %v2206 = vsub.f32 1.0, %v2205
    %v2207 = vmul.f32 %v2204, %v2206
    %v2208 = vadd.f32 %v2204, %v2207
    %vm2209 = vweird.f32 %v2203
    %vm2210 = vweird.f32 %v2204
    %vm2211 = vmor %vm2209, %vm2210
    %v2212 = vsel %vm2211, %v2204, %v2208
    %v2213 = vand.u32 2147483647, %v2203
    %vm2214 = vcmp.eq.f32.partialorder %v2213, 8.507059e+37
    %v2215 = vand.u32 %v2203, 2147483648
    %v2216 = vor.u32 1.1754944e-38, %v2215
    %v2217 = vsel %vm2214, %v2216, %v2212
    %v2218 = vmul.f32 %v2193, %v2217
    %v2219 = vmin.f32 %v2218, 1.0
    %v2220 = vmax.f32 %v2219, -1.0
    %v2221 = vadd.f32 %v2100, 1.0
    %v2222 = vadd.f32 %v2140, 1.0
    %v2223 = vadd.f32 %v2180, 1.0
    %v2224 = vadd.f32 %v2220, 1.0
    %v2225 = vmul.f32 %v2053, %v2221
    %v2226 = vmul.f32 %v2054, %v2222
    %v2227 = vmul.f32 %v2055, %v2223
    %v2228 = vmul.f32 %v2056, %v2224
    %v2229 = vmul.f32 %v2012, %v2225
    %v2230 = vmul.f32 %v2015, %v2226
    %v2231 = vmul.f32 %v2018, %v2227
    %v2232 = vmul.f32 %v2021, %v2228
    %2233 = vmatpush.msra.mxu0 %v62
    %2234 = vmatpush.msra.mxu0 %v61
    %2235 = vmatpush.msra.mxu0 %v60
    %2236 = vmatpush.msra.mxu0 %v59
    %2237 = vmatpush.msra.mxu0 %v58
    %2238 = vmatpush.msra.mxu0 %v57
    %2239 = vmatpush.msra.mxu0 %v56
    %2240 = vmatpush.msra.mxu0 %v55
    %2241 = vmatpush.msra.mxu0 %v54
    %2242 = vmatpush.msra.mxu0 %v53
    %2243 = vmatpush.msra.mxu0 %v52
    %2244 = vmatpush.msra.mxu0 %v51
    %2245 = vmatpush.msra.mxu0 %v50
    %2246 = vmatpush.msra.mxu0 %v49
    %2247 = vmatpush.msra.mxu0 %v48
    %2248 = vmatpush.msra.mxu0 %v47
    %2249 = vmatmul.f32.gmra.mxu0 %v2229
    %v2250 = vpop.f32.mrf.mxu0
    %v2251 = vadd.f32 0.0, %v2250
    %2252 = vmatmul.f32.gmra.mxu0 %v2230
    %v2253 = vpop.f32.mrf.mxu0
    %v2254 = vadd.f32 0.0, %v2253
    %2255 = vmatmul.f32.gmra.mxu0 %v2231
    %v2256 = vpop.f32.mrf.mxu0
    %v2257 = vadd.f32 0.0, %v2256
    %2258 = vmatmul.f32.gmra.mxu0 %v2232
    %v2259 = vpop.f32.mrf.mxu0
    %v2260 = vadd.f32 0.0, %v2259
    %2261 = vdwg.mxu0
    %v2262 = vadd.f32 %v1879, %v2251
    %v2263 = vadd.f32 %v1880, %v2254
    %v2264 = vadd.f32 %v1881, %v2257
    %v2265 = vadd.f32 %v1882, %v2260
    %v2266 = vperm.slane %v73, 0
    %v2267 = vadd.f32 %v2262, %v2266
    %v2268 = vadd.f32 %v2263, %v2266
    %v2269 = vadd.f32 %v2264, %v2266
    %v2270 = vadd.f32 %v2265, %v2266
    %2271 = vst.msk [vmem:[#allocation2] sm:$0xff] %vm95, %v2267
    %2272 = vst.msk [vmem:[#allocation2 + $0x8] sm:$0xff] %vm95, %v2268
    %2273 = vst.msk [vmem:[#allocation2 + $0x10] sm:$0xff] %vm95, %v2269
    %2274 = vst.msk [vmem:[#allocation2 + $0x18] sm:$0xff] %vm95, %v2270
    // Predicated region
    $region14: #{basic_transformer_block.1} parent=1 // pred_check
      _
    $region15: #{basic_transformer_block.1} parent=1 // pred_check_branch
      %2276 = sbr.rel (0) target = $region17
    $region16: #{basic_transformer_block.1} parent=1 // pred_region
      %2278 = vsyncadd [#allocation3], 0
      %s2279 = sshll.u32 [#allocation2], 4
      %s2280 = int_to_ptr.vmem [resolvable:$true] %s2279
      %s2281 = sshll.u32 %s3, 4
      %s2282 = int_to_ptr.hbm [resolvable:$true] %s2281
      %2287 = dma.vmem_to_hbm [thread:$0]  %s2280, 512, %s2282, [#allocation3], 128, 128, 8
    $region17: #{basic_transformer_block.1} parent=1 // pred_fallthru
      _
    // Predicated region
    $region18: #{basic_transformer_block.1} parent=1 // pred_check
      _
    $region19: #{basic_transformer_block.1} parent=1 // pred_check_branch
      %2289 = sbr.rel (0) target = $region21
    $region20: #{basic_transformer_block.1} parent=1 // pred_region
      %2291 = dma.done [#allocation3], 512
    $region21: #{basic_transformer_block.1} parent=1 // pred_fallthru
      _
    %2292 = vsyncpa [#allocation3], 1

</llo_original>
